<compile_context>
chip_gen: v5e
topology: v5e:2x2
jax: 0.10.0
libtpu: 0.0.40
codegen_flags: <defaults>
</compile_context>

<pallas_src>
import functools

import jax
import jax.numpy as jnp
from jax.experimental import pallas as pl
from jax.experimental.pallas import tpu as pltpu


# ----------------------------------------------------------------------------
# Pallas kernels
# ----------------------------------------------------------------------------
def _conv_relu_pool_kernel(p_ref, w_ref, b_ref, o_ref):
    """Fused conv(3x3,pad=1) + bias + ReLU + MaxPool(2x2) as a single matmul.

    p_ref: (K, 4*M) bf16 im2col patches, K = 9*Cin taps.  Columns are ordered
           (pool_pos, n, pooled_pixel); the 4 pool positions are contiguous
           lane chunks of size M = N*Ho*Wo (multiple of 128 -> lane dense).
    w_ref: (Cout, K) bf16 conv weights (transposed so the matmul output is
           lane-dense along spatial, not along Cout=8/16).
    b_ref: (Cout, 1) f32 bias.
    o_ref: (Cout, M) bf16 pooled activations, layout (c, n*Ho*Wo + pixel).
    """
    m = o_ref.shape[-1]
    # ONE MXU matmul for the whole batch and all 4 pool positions (f32 acc).
    z = jnp.dot(w_ref[...], p_ref[...], preferred_element_type=jnp.float32)
    # 2x2 max-pool = max over 4 contiguous, 128-aligned lane chunks.
    pooled = jnp.maximum(jnp.maximum(z[:, 0:m], z[:, m:2 * m]),
                         jnp.maximum(z[:, 2 * m:3 * m], z[:, 3 * m:4 * m]))
    # Bias hoisted out of the max (max_k(z_k)+b == max_k(z_k+b)); ReLU last;
    # cast folds into the store.
    o_ref[...] = jnp.maximum(pooled + b_ref[...], 0.0).astype(o_ref.dtype)


def _conv2_pool_classifier_kernel(p_ref, w_ref, b_ref, fc1_ref, fb1_ref,
                                  fc2_ref, fb2_ref, o_ref, x2_ref):
    """conv2 + bias + ReLU + MaxPool(2x2) + flatten + Linear + ReLU + Linear.

    p_ref  : (72, 4*M) bf16 im2col patches of the conv1 activations, M = N*64.
    w_ref  : (16, 72) bf16;  b_ref: (16, 1) f32.
    fc1_ref: (1024, 64) bf16; fb1_ref: (1, 64) f32.
    fc2_ref: (64, Cpad) bf16; fb2_ref: (1, Cpad) f32 (classes zero-padded).
    o_ref  : (N, Cpad) f32 logits (lane-dense store; real classes sliced later).
    x2_ref : (N, 1024) f32 VMEM scratch used for the NCHW-order flatten.
    Dropout(0.2) is identity at eval time.
    """
    n, feat = x2_ref.shape
    cout = w_ref.shape[0]
    pix = feat // cout            # pooled pixels per channel per image (64)
    m = n * pix

    # conv2 + pool + bias + ReLU, same one-matmul scheme as layer 1.
    z = jnp.dot(w_ref[...], p_ref[...], preferred_element_type=jnp.float32)
    pooled = jnp.maximum(jnp.maximum(z[:, 0:m], z[:, m:2 * m]),
                         jnp.maximum(z[:, 2 * m:3 * m], z[:, 3 * m:4 * m]))
    a2 = jnp.maximum(pooled + b_ref[...], 0.0)           # (16, N*64) f32

    # AdaptiveAvgPool2d((8,8)) is identity here (wrapper guarantees 8x8).
    # Flatten (c, n*64+pix) -> (n, c*64+pix)  (PyTorch x.view(N,-1) order)
    # via static sub-vreg slice stores into VMEM scratch (no register
    # lane<->sublane relayout).
    for img in range(n):
        for c in range(cout):
            x2_ref[img:img + 1, c * pix:(c + 1) * pix] = (
                a2[c:c + 1, img * pix:(img + 1) * pix])

    x2 = x2_ref[...].astype(fc1_ref.dtype)                # (N, 1024) bf16
    h = jnp.dot(x2, fc1_ref[...],
                preferred_element_type=jnp.float32) + fb1_ref[...]
    h = jnp.maximum(h, 0.0).astype(fc2_ref.dtype)         # (N, 64)
    o_ref[...] = jnp.dot(h, fc2_ref[...],
                         preferred_element_type=jnp.float32) + fb2_ref[...]


# ----------------------------------------------------------------------------
# pallas_call wrappers
# ----------------------------------------------------------------------------
def _conv_relu_pool(patches, w, b, m, out_dtype=jnp.bfloat16):
    cout, k = w.shape
    return pl.pallas_call(
        _conv_relu_pool_kernel,
        out_shape=jax.ShapeDtypeStruct((cout, m), out_dtype),
        grid=(1,),
        in_specs=[
            pl.BlockSpec((k, 4 * m), lambda i: (0, 0)),
            pl.BlockSpec((cout, k), lambda i: (0, 0)),
            pl.BlockSpec((cout, 1), lambda i: (0, 0)),
        ],
        out_specs=pl.BlockSpec((cout, m), lambda i: (0, 0)),
        compiler_params=pltpu.CompilerParams(dimension_semantics=("arbitrary",)),
    )(patches, w, b)


def _conv2_pool_classifier(patches, w, b, fc1, fb1, fc2, fb2, n):
    cout, k = w.shape
    feat = fc1.shape[0]
    hdim = fc1.shape[1]
    cpad = fc2.shape[1]
    m = patches.shape[1] // 4
    assert m == n * (feat // cout), (m, n, feat, cout)
    return pl.pallas_call(
        _conv2_pool_classifier_kernel,
        out_shape=jax.ShapeDtypeStruct((n, cpad), jnp.float32),
        grid=(1,),
        in_specs=[
            pl.BlockSpec((k, 4 * m), lambda i: (0, 0)),
            pl.BlockSpec((cout, k), lambda i: (0, 0)),
            pl.BlockSpec((cout, 1), lambda i: (0, 0)),
            pl.BlockSpec((feat, hdim), lambda i: (0, 0)),
            pl.BlockSpec((1, hdim), lambda i: (0, 0)),
            pl.BlockSpec((hdim, cpad), lambda i: (0, 0)),
            pl.BlockSpec((1, cpad), lambda i: (0, 0)),
        ],
        out_specs=pl.BlockSpec((n, cpad), lambda i: (0, 0)),
        scratch_shapes=[pltpu.VMEM((n, feat), jnp.float32)],
        compiler_params=pltpu.CompilerParams(dimension_semantics=("arbitrary",)),
    )(patches, w, b, fc1, fb1, fc2, fb2)


# ----------------------------------------------------------------------------
# Glue: im2col patch extraction (thin XLA fusion), parameter prep (one-time)
# ----------------------------------------------------------------------------
def _pool_patches(a):
    """a: (Cin, N, H, W) -> im2col patches (9*Cin, 4*N*(H//2)*(W//2)), bf16.

    Row k = (dh*3+dw)*Cin + ci;  column = pool_pos*(N*Ho*Wo) + n*Ho*Wo + i*Wo + j.
    # TODO(synk): fully in-kernel im2col would need lane<->sublane relayouts;
    # kept as wrapper glue (one fused pad/stack per layer).
    """
    cin, n, h, w = a.shape
    ho, wo = h // 2, w // 2
    ap = jnp.pad(a, ((0, 0), (0, 0), (1, 1), (1, 1)))
    taps = jnp.stack([ap[:, :, dh:dh + h, dw:dw + w]
                      for dh in range(3) for dw in range(3)], axis=0)   # (9,Cin,N,H,W)
    pools = jnp.stack([taps[:, :, :, po::2, qo::2]
                       for po in (0, 1) for qo in (0, 1)], axis=2)      # (9,Cin,4,N,Ho,Wo)
    m = n * ho * wo
    return pools.reshape(9 * cin, 4 * m).astype(jnp.bfloat16), m


def prepare_params(params):
    """One-time weight-layout prep: transposed conv mats, transposed fc weights,
    class-lane padding (128), bf16 cast for MXU operands (f32 accumulation)."""
    co1 = params["conv1_w"].shape[0]
    co2 = params["conv2_w"].shape[0]
    hdim = params["fc1_w"].shape[0]
    ncls = params["fc2_w"].shape[0]
    cpad = max(128, -(-ncls // 128) * 128)

    # conv weight (Cout,Cin,3,3) -> (Cout, K) with K-order (dh,dw,ci).
    w1 = params["conv1_w"].transpose(0, 2, 3, 1).reshape(co1, -1).astype(jnp.bfloat16)
    w2 = params["conv2_w"].transpose(0, 2, 3, 1).reshape(co2, -1).astype(jnp.bfloat16)
    b1 = params["conv1_b"].reshape(co1, 1).astype(jnp.float32)
    b2 = params["conv2_b"].reshape(co2, 1).astype(jnp.float32)

    # fc1 stays un-padded (hidden never leaves vregs); only the final logits
    # need a 128-lane-dense store, so fc2 lanes are zero-padded to cpad.
    fc1 = params["fc1_w"].T.astype(jnp.bfloat16)                       # (1024, 64)
    fb1 = params["fc1_b"][None, :].astype(jnp.float32)                 # (1, 64)
    fc2 = jnp.zeros((hdim, cpad), jnp.float32).at[:, :ncls].set(params["fc2_w"].T)
    fb2 = jnp.zeros((1, cpad), jnp.float32).at[:, :ncls].set(params["fc2_b"][None, :])

    return {"w1": w1, "b1": b1, "w2": w2, "b2": b2,
            "fc1": fc1, "fb1": fb1,
            "fc2": fc2.astype(jnp.bfloat16), "fb2": fb2}


@functools.partial(jax.jit, static_argnames=("num_classes",))
def piano_classifier_forward(x_nchw, prep, num_classes):
    n, _, h, w = x_nchw.shape
    h2, w2sp = h // 4, w // 4
    # TODO(synk): the fused conv2+classifier kernel assumes the post-pool
    # spatial is already 8x8 (AdaptiveAvgPool2d identity, i.e. 32x32 input);
    # PyTorch's uneven-bin adaptive pooling for other sizes is not implemented.
    assert h2 == 8 and w2sp == 8, (h2, w2sp)

    # ---- conv1 -> ReLU -> pool (one matmul kernel, bf16 output) --------------
    a0 = jnp.transpose(x_nchw, (1, 0, 2, 3))                    # (Cin=1, N, H, W)
    p1, m1 = _pool_patches(a0)
    a1 = _conv_relu_pool(p1, prep["w1"], prep["b1"], m1)        # (8, N*16*16) bf16

    # ---- conv2 -> ReLU -> pool -> adaptive(8,8) -> flatten -> MLP (fused) ----
    p2, _ = _pool_patches(a1.reshape(8, n, h // 2, w // 2))
    logits = _conv2_pool_classifier(p2, prep["w2"], prep["b2"],
                                    prep["fc1"], prep["fb1"],
                                    prep["fc2"], prep["fb2"], n)  # (N, 128)
    return logits[:, :num_classes]


# ----------------------------------------------------------------------------
# Pure-JAX f32 reference (numerical sanity check, no torch involved)
# ----------------------------------------------------------------------------
def reference_forward(x_nchw, params):
    x = jnp.transpose(x_nchw, (0, 2, 3, 1))

    def conv(x, w, b):
        y = jax.lax.conv_general_dilated(
            x, jnp.transpose(w, (2, 3, 1, 0)), (1, 1), "SAME",
            dimension_numbers=("NHWC", "HWIO", "NHWC"))
        return y + b

    def maxpool(y):
        return jax.lax.reduce_window(y, -jnp.inf, jax.lax.max,
                                     (1, 2, 2, 1), (1, 2, 2, 1), "VALID")

    y = maxpool(jax.nn.relu(conv(x, params["conv1_w"], params["conv1_b"])))
    y = maxpool(jax.nn.relu(conv(y, params["conv2_w"], params["conv2_b"])))
    n, hh, ww, c = y.shape
    y = y.reshape(n, 8, hh // 8, 8, ww // 8, c).mean(axis=(2, 4))
    y = jnp.transpose(y, (0, 3, 1, 2)).reshape(n, -1)
    h = jax.nn.relu(y @ params["fc1_w"].T + params["fc1_b"])
    return h @ params["fc2_w"].T + params["fc2_b"]


# ----------------------------------------------------------------------------
# Main
# ----------------------------------------------------------------------------
if __name__ == "__main__":
    num_classes = 10
    N, H, W = 2, 32, 32

    key = jax.random.PRNGKey(0)
    kx, k1, k2, k3, k4, k5, k6, k7, k8 = jax.random.split(key, 9)

    params = {
        "conv1_w": 0.1 * jax.random.normal(k1, (8, 1, 3, 3), jnp.float32),
        "conv1_b": 0.1 * jax.random.normal(k2, (8,), jnp.float32),
        "conv2_w": 0.1 * jax.random.normal(k3, (16, 8, 3, 3), jnp.float32),
        "conv2_b": 0.1 * jax.random.normal(k4, (16,), jnp.float32),
        "fc1_w": 0.05 * jax.random.normal(k5, (64, 16 * 8 * 8), jnp.float32),
        "fc1_b": 0.05 * jax.random.normal(k6, (64,), jnp.float32),
        "fc2_w": 0.1 * jax.random.normal(k7, (num_classes, 64), jnp.float32),
        "fc2_b": 0.1 * jax.random.normal(k8, (num_classes,), jnp.float32),
    }

    x = jax.random.normal(kx, (N, 1, H, W), jnp.float32)  # NCHW, as in PyTorch

    prep = prepare_params(params)  # one-time layout prep, outside the jit
    out = piano_classifier_forward(x, prep, num_classes)
    out = jax.block_until_ready(out)
    assert out.shape == (N, num_classes), out.shape

    ref = jax.block_until_ready(reference_forward(x, params))
    err = float(jnp.max(jnp.abs(out - ref)))
    # bf16 MXU operands / bf16 inter-kernel activations with f32 accumulation.
    assert err < 5e-2, err

    print("KERNEL_OK")
</pallas_src>

<mosaic_0001>
module attributes {stable_mosaic.version = 11 : i64} {
  func.func @_conv_relu_pool_kernel(%arg0: i32, %arg1: memref<9x2048xbf16, #tpu.memory_space<vmem>>, %arg2: memref<8x9xbf16, #tpu.memory_space<vmem>>, %arg3: memref<8x1xf32, #tpu.memory_space<vmem>>, %arg4: memref<8x512xbf16, #tpu.memory_space<vmem>>) attributes {dimension_semantics = [#tpu.dimension_semantics<arbitrary>], iteration_bounds = array<i64: 1>, scalar_prefetch = 0 : i64, scratch_operands = 0 : i64, tpu.core_type = #tpu.core_type<tc>, window_params = [{pipeline_mode = #tpu.pipeline_mode<synchronous>, transform_indices = @transform_0, window_bounds = array<i64: 9, 2048>}, {pipeline_mode = #tpu.pipeline_mode<synchronous>, transform_indices = @transform_1, window_bounds = array<i64: 8, 9>}, {pipeline_mode = #tpu.pipeline_mode<synchronous>, transform_indices = @transform_2, window_bounds = array<i64: 8, 1>}, {pipeline_mode = #tpu.pipeline_mode<synchronous>, transform_indices = @transform_3, window_bounds = array<i64: 8, 512>}]} {
    %c0 = arith.constant 0 : index
    %c0_0 = arith.constant 0 : index
    %0 = vector.load %arg2[%c0, %c0_0] : memref<8x9xbf16, #tpu.memory_space<vmem>>, vector<8x9xbf16>
    %c0_1 = arith.constant 0 : index
    %c0_2 = arith.constant 0 : index
    %1 = vector.load %arg1[%c0_1, %c0_2] : memref<9x2048xbf16, #tpu.memory_space<vmem>>, vector<9x2048xbf16>
    %cst = arith.constant dense<0.000000e+00> : vector<8x2048xf32>
    %2 = tpu.matmul %0, %1, %cst {dimension_numbers = #tpu.dot_dimension_numbers<[1], [0], [0], [1], [0, 0, 1, 1], [], []>} : vector<8x9xbf16>, vector<9x2048xbf16>, vector<8x2048xf32> -> vector<8x2048xf32>
    %3 = vector.extract_strided_slice %2 {offsets = [0, 0], sizes = [8, 512], strides = [1, 1]} : vector<8x2048xf32> to vector<8x512xf32>
    %4 = vector.extract_strided_slice %2 {offsets = [0, 512], sizes = [8, 512], strides = [1, 1]} : vector<8x2048xf32> to vector<8x512xf32>
    %5 = arith.maximumf %3, %4 : vector<8x512xf32>
    %6 = vector.extract_strided_slice %2 {offsets = [0, 1024], sizes = [8, 512], strides = [1, 1]} : vector<8x2048xf32> to vector<8x512xf32>
    %7 = vector.extract_strided_slice %2 {offsets = [0, 1536], sizes = [8, 512], strides = [1, 1]} : vector<8x2048xf32> to vector<8x512xf32>
    %8 = arith.maximumf %6, %7 : vector<8x512xf32>
    %9 = arith.maximumf %5, %8 : vector<8x512xf32>
    %c0_3 = arith.constant 0 : index
    %c0_4 = arith.constant 0 : index
    %10 = vector.load %arg3[%c0_3, %c0_4] : memref<8x1xf32, #tpu.memory_space<vmem>>, vector<8x1xf32>
    %11 = vector.broadcast %10 : vector<8x1xf32> to vector<8x512xf32>
    %12 = arith.addf %9, %11 : vector<8x512xf32>
    %cst_5 = arith.constant 0.000000e+00 : f32
    %13 = vector.broadcast %cst_5 : f32 to vector<8x512xf32>
    %14 = arith.maximumf %12, %13 : vector<8x512xf32>
    %15 = arith.truncf %14 : vector<8x512xf32> to vector<8x512xbf16>
    %c0_6 = arith.constant 0 : index
    %c0_7 = arith.constant 0 : index
    %16 = vector.load %arg4[%c0_6, %c0_7] : memref<8x512xbf16, #tpu.memory_space<vmem>>, vector<8x512xbf16>
    tpu.vector_store %arg4[%c0_6, %c0_7], %15 {strides = array<i32>} : memref<8x512xbf16, #tpu.memory_space<vmem>>, vector<8x512xbf16>,
    return
  }
  func.func @transform_0(%arg0: i32) -> (i32, i32) {
    %c0_i32 = arith.constant 0 : i32
    %c0_i32_0 = arith.constant 0 : i32
    %c0_i32_1 = arith.constant 0 : i32
    return %c0_i32, %c0_i32_0 : i32, i32
  }
  func.func @transform_1(%arg0: i32) -> (i32, i32) {
    %c0_i32 = arith.constant 0 : i32
    %c0_i32_0 = arith.constant 0 : i32
    %c0_i32_1 = arith.constant 0 : i32
    return %c0_i32, %c0_i32_0 : i32, i32
  }
  func.func @transform_2(%arg0: i32) -> (i32, i32) {
    %c0_i32 = arith.constant 0 : i32
    %c0_i32_0 = arith.constant 0 : i32
    %c0_i32_1 = arith.constant 0 : i32
    return %c0_i32, %c0_i32_0 : i32, i32
  }
  func.func @transform_3(%arg0: i32) -> (i32, i32) {
    %c0_i32 = arith.constant 0 : i32
    %c0_i32_0 = arith.constant 0 : i32
    %c0_i32_1 = arith.constant 0 : i32
    return %c0_i32, %c0_i32_0 : i32, i32
  }
}

module attributes {stable_mosaic.version = 11 : i64} {
  func.func @_conv2_pool_classifier_kernel(%arg0: i32, %arg1: memref<72x512xbf16, #tpu.memory_space<vmem>>, %arg2: memref<16x72xbf16, #tpu.memory_space<vmem>>, %arg3: memref<16x1xf32, #tpu.memory_space<vmem>>, %arg4: memref<1024x64xbf16, #tpu.memory_space<vmem>>, %arg5: memref<1x64xf32, #tpu.memory_space<vmem>>, %arg6: memref<64x128xbf16, #tpu.memory_space<vmem>>, %arg7: memref<1x128xf32, #tpu.memory_space<vmem>>, %arg8: memref<2x128xf32, #tpu.memory_space<vmem>>, %arg9: memref<2x1024xf32, #tpu.memory_space<vmem>>) attributes {dimension_semantics = [#tpu.dimension_semantics<arbitrary>], iteration_bounds = array<i64: 1>, scalar_prefetch = 0 : i64, scratch_operands = 1 : i64, tpu.core_type = #tpu.core_type<tc>, window_params = [{pipeline_mode = #tpu.pipeline_mode<synchronous>, transform_indices = @transform_0, window_bounds = array<i64: 72, 512>}, {pipeline_mode = #tpu.pipeline_mode<synchronous>, transform_indices = @transform_1, window_bounds = array<i64: 16, 72>}, {pipeline_mode = #tpu.pipeline_mode<synchronous>, transform_indices = @transform_2, window_bounds = array<i64: 16, 1>}, {pipeline_mode = #tpu.pipeline_mode<synchronous>, transform_indices = @transform_3, window_bounds = array<i64: 1024, 64>}, {pipeline_mode = #tpu.pipeline_mode<synchronous>, transform_indices = @transform_4, window_bounds = array<i64: 1, 64>}, {pipeline_mode = #tpu.pipeline_mode<synchronous>, transform_indices = @transform_5, window_bounds = array<i64: 64, 128>}, {pipeline_mode = #tpu.pipeline_mode<synchronous>, transform_indices = @transform_6, window_bounds = array<i64: 1, 128>}, {pipeline_mode = #tpu.pipeline_mode<synchronous>, transform_indices = @transform_7, window_bounds = array<i64: 2, 128>}]} {
    %c0 = arith.constant 0 : index
    %c0_0 = arith.constant 0 : index
    %0 = vector.load %arg2[%c0, %c0_0] : memref<16x72xbf16, #tpu.memory_space<vmem>>, vector<16x72xbf16>
    %c0_1 = arith.constant 0 : index
    %c0_2 = arith.constant 0 : index
    %1 = vector.load %arg1[%c0_1, %c0_2] : memref<72x512xbf16, #tpu.memory_space<vmem>>, vector<72x512xbf16>
    %cst = arith.constant dense<0.000000e+00> : vector<16x512xf32>
    %2 = tpu.matmul %0, %1, %cst {dimension_numbers = #tpu.dot_dimension_numbers<[1], [0], [0], [1], [0, 0, 1, 1], [], []>} : vector<16x72xbf16>, vector<72x512xbf16>, vector<16x512xf32> -> vector<16x512xf32>
    %3 = vector.extract_strided_slice %2 {offsets = [0, 0], sizes = [16, 128], strides = [1, 1]} : vector<16x512xf32> to vector<16x128xf32>
    %4 = vector.extract_strided_slice %2 {offsets = [0, 128], sizes = [16, 128], strides = [1, 1]} : vector<16x512xf32> to vector<16x128xf32>
    %5 = arith.maximumf %3, %4 : vector<16x128xf32>
    %6 = vector.extract_strided_slice %2 {offsets = [0, 256], sizes = [16, 128], strides = [1, 1]} : vector<16x512xf32> to vector<16x128xf32>
    %7 = vector.extract_strided_slice %2 {offsets = [0, 384], sizes = [16, 128], strides = [1, 1]} : vector<16x512xf32> to vector<16x128xf32>
    %8 = arith.maximumf %6, %7 : vector<16x128xf32>
    %9 = arith.maximumf %5, %8 : vector<16x128xf32>
    %c0_3 = arith.constant 0 : index
    %c0_4 = arith.constant 0 : index
    %10 = vector.load %arg3[%c0_3, %c0_4] : memref<16x1xf32, #tpu.memory_space<vmem>>, vector<16x1xf32>
    %11 = vector.broadcast %10 : vector<16x1xf32> to vector<16x128xf32>
    %12 = arith.addf %9, %11 : vector<16x128xf32>
    %cst_5 = arith.constant 0.000000e+00 : f32
    %13 = vector.broadcast %cst_5 : f32 to vector<16x128xf32>
    %14 = arith.maximumf %12, %13 : vector<16x128xf32>
    %15 = vector.extract_strided_slice %14 {offsets = [0, 0], sizes = [1, 64], strides = [1, 1]} : vector<16x128xf32> to vector<1x64xf32>
    %c0_6 = arith.constant 0 : index
    %c0_7 = arith.constant 0 : index
    %16 = vector.load %arg9[%c0_6, %c0_7] : memref<2x1024xf32, #tpu.memory_space<vmem>>, vector<1x64xf32>
    tpu.vector_store %arg9[%c0_6, %c0_7], %15 {strides = array<i32>} : memref<2x1024xf32, #tpu.memory_space<vmem>>, vector<1x64xf32>,
    %17 = vector.extract_strided_slice %14 {offsets = [1, 0], sizes = [1, 64], strides = [1, 1]} : vector<16x128xf32> to vector<1x64xf32>
    %c0_8 = arith.constant 0 : index
    %c64 = arith.constant 64 : index
    %18 = vector.load %arg9[%c0_8, %c64] : memref<2x1024xf32, #tpu.memory_space<vmem>>, vector<1x64xf32>
    tpu.vector_store %arg9[%c0_8, %c64], %17 {strides = array<i32>} : memref<2x1024xf32, #tpu.memory_space<vmem>>, vector<1x64xf32>,
    %19 = vector.extract_strided_slice %14 {offsets = [2, 0], sizes = [1, 64], strides = [1, 1]} : vector<16x128xf32> to vector<1x64xf32>
    %c0_9 = arith.constant 0 : index
    %c128 = arith.constant 128 : index
    %20 = vector.load %arg9[%c0_9, %c128] : memref<2x1024xf32, #tpu.memory_space<vmem>>, vector<1x64xf32>
    tpu.vector_store %arg9[%c0_9, %c128], %19 {strides = array<i32>} : memref<2x1024xf32, #tpu.memory_space<vmem>>, vector<1x64xf32>,
    %21 = vector.extract_strided_slice %14 {offsets = [3, 0], sizes = [1, 64], strides = [1, 1]} : vector<16x128xf32> to vector<1x64xf32>
    %c0_10 = arith.constant 0 : index
    %c192 = arith.constant 192 : index
    %22 = vector.load %arg9[%c0_10, %c192] : memref<2x1024xf32, #tpu.memory_space<vmem>>, vector<1x64xf32>
    tpu.vector_store %arg9[%c0_10, %c192], %21 {strides = array<i32>} : memref<2x1024xf32, #tpu.memory_space<vmem>>, vector<1x64xf32>,
    %23 = vector.extract_strided_slice %14 {offsets = [4, 0], sizes = [1, 64], strides = [1, 1]} : vector<16x128xf32> to vector<1x64xf32>
    %c0_11 = arith.constant 0 : index
    %c256 = arith.constant 256 : index
    %24 = vector.load %arg9[%c0_11, %c256] : memref<2x1024xf32, #tpu.memory_space<vmem>>, vector<1x64xf32>
    tpu.vector_store %arg9[%c0_11, %c256], %23 {strides = array<i32>} : memref<2x1024xf32, #tpu.memory_space<vmem>>, vector<1x64xf32>,
    %25 = vector.extract_strided_slice %14 {offsets = [5, 0], sizes = [1, 64], strides = [1, 1]} : vector<16x128xf32> to vector<1x64xf32>
    %c0_12 = arith.constant 0 : index
    %c320 = arith.constant 320 : index
    %26 = vector.load %arg9[%c0_12, %c320] : memref<2x1024xf32, #tpu.memory_space<vmem>>, vector<1x64xf32>
    tpu.vector_store %arg9[%c0_12, %c320], %25 {strides = array<i32>} : memref<2x1024xf32, #tpu.memory_space<vmem>>, vector<1x64xf32>,
    %27 = vector.extract_strided_slice %14 {offsets = [6, 0], sizes = [1, 64], strides = [1, 1]} : vector<16x128xf32> to vector<1x64xf32>
    %c0_13 = arith.constant 0 : index
    %c384 = arith.constant 384 : index
    %28 = vector.load %arg9[%c0_13, %c384] : memref<2x1024xf32, #tpu.memory_space<vmem>>, vector<1x64xf32>
    tpu.vector_store %arg9[%c0_13, %c384], %27 {strides = array<i32>} : memref<2x1024xf32, #tpu.memory_space<vmem>>, vector<1x64xf32>,
    %29 = vector.extract_strided_slice %14 {offsets = [7, 0], sizes = [1, 64], strides = [1, 1]} : vector<16x128xf32> to vector<1x64xf32>
    %c0_14 = arith.constant 0 : index
    %c448 = arith.constant 448 : index
    %30 = vector.load %arg9[%c0_14, %c448] : memref<2x1024xf32, #tpu.memory_space<vmem>>, vector<1x64xf32>
    tpu.vector_store %arg9[%c0_14, %c448], %29 {strides = array<i32>} : memref<2x1024xf32, #tpu.memory_space<vmem>>, vector<1x64xf32>,
    %31 = vector.extract_strided_slice %14 {offsets = [8, 0], sizes = [1, 64], strides = [1, 1]} : vector<16x128xf32> to vector<1x64xf32>
    %c0_15 = arith.constant 0 : index
    %c512 = arith.constant 512 : index
    %32 = vector.load %arg9[%c0_15, %c512] : memref<2x1024xf32, #tpu.memory_space<vmem>>, vector<1x64xf32>
    tpu.vector_store %arg9[%c0_15, %c512], %31 {strides = array<i32>} : memref<2x1024xf32, #tpu.memory_space<vmem>>, vector<1x64xf32>,
    %33 = vector.extract_strided_slice %14 {offsets = [9, 0], sizes = [1, 64], strides = [1, 1]} : vector<16x128xf32> to vector<1x64xf32>
    %c0_16 = arith.constant 0 : index
    %c576 = arith.constant 576 : index
    %34 = vector.load %arg9[%c0_16, %c576] : memref<2x1024xf32, #tpu.memory_space<vmem>>, vector<1x64xf32>
    tpu.vector_store %arg9[%c0_16, %c576], %33 {strides = array<i32>} : memref<2x1024xf32, #tpu.memory_space<vmem>>, vector<1x64xf32>,
    %35 = vector.extract_strided_slice %14 {offsets = [10, 0], sizes = [1, 64], strides = [1, 1]} : vector<16x128xf32> to vector<1x64xf32>
    %c0_17 = arith.constant 0 : index
    %c640 = arith.constant 640 : index
    %36 = vector.load %arg9[%c0_17, %c640] : memref<2x1024xf32, #tpu.memory_space<vmem>>, vector<1x64xf32>
    tpu.vector_store %arg9[%c0_17, %c640], %35 {strides = array<i32>} : memref<2x1024xf32, #tpu.memory_space<vmem>>, vector<1x64xf32>,
    %37 = vector.extract_strided_slice %14 {offsets = [11, 0], sizes = [1, 64], strides = [1, 1]} : vector<16x128xf32> to vector<1x64xf32>
    %c0_18 = arith.constant 0 : index
    %c704 = arith.constant 704 : index
    %38 = vector.load %arg9[%c0_18, %c704] : memref<2x1024xf32, #tpu.memory_space<vmem>>, vector<1x64xf32>
    tpu.vector_store %arg9[%c0_18, %c704], %37 {strides = array<i32>} : memref<2x1024xf32, #tpu.memory_space<vmem>>, vector<1x64xf32>,
    %39 = vector.extract_strided_slice %14 {offsets = [12, 0], sizes = [1, 64], strides = [1, 1]} : vector<16x128xf32> to vector<1x64xf32>
    %c0_19 = arith.constant 0 : index
    %c768 = arith.constant 768 : index
    %40 = vector.load %arg9[%c0_19, %c768] : memref<2x1024xf32, #tpu.memory_space<vmem>>, vector<1x64xf32>
    tpu.vector_store %arg9[%c0_19, %c768], %39 {strides = array<i32>} : memref<2x1024xf32, #tpu.memory_space<vmem>>, vector<1x64xf32>,
    %41 = vector.extract_strided_slice %14 {offsets = [13, 0], sizes = [1, 64], strides = [1, 1]} : vector<16x128xf32> to vector<1x64xf32>
    %c0_20 = arith.constant 0 : index
    %c832 = arith.constant 832 : index
    %42 = vector.load %arg9[%c0_20, %c832] : memref<2x1024xf32, #tpu.memory_space<vmem>>, vector<1x64xf32>
    tpu.vector_store %arg9[%c0_20, %c832], %41 {strides = array<i32>} : memref<2x1024xf32, #tpu.memory_space<vmem>>, vector<1x64xf32>,
    %43 = vector.extract_strided_slice %14 {offsets = [14, 0], sizes = [1, 64], strides = [1, 1]} : vector<16x128xf32> to vector<1x64xf32>
    %c0_21 = arith.constant 0 : index
    %c896 = arith.constant 896 : index
    %44 = vector.load %arg9[%c0_21, %c896] : memref<2x1024xf32, #tpu.memory_space<vmem>>, vector<1x64xf32>
    tpu.vector_store %arg9[%c0_21, %c896], %43 {strides = array<i32>} : memref<2x1024xf32, #tpu.memory_space<vmem>>, vector<1x64xf32>,
    %45 = vector.extract_strided_slice %14 {offsets = [15, 0], sizes = [1, 64], strides = [1, 1]} : vector<16x128xf32> to vector<1x64xf32>
    %c0_22 = arith.constant 0 : index
    %c960 = arith.constant 960 : index
    %46 = vector.load %arg9[%c0_22, %c960] : memref<2x1024xf32, #tpu.memory_space<vmem>>, vector<1x64xf32>
    tpu.vector_store %arg9[%c0_22, %c960], %45 {strides = array<i32>} : memref<2x1024xf32, #tpu.memory_space<vmem>>, vector<1x64xf32>,
    %47 = vector.extract_strided_slice %14 {offsets = [0, 64], sizes = [1, 64], strides = [1, 1]} : vector<16x128xf32> to vector<1x64xf32>
    %c1 = arith.constant 1 : index
    %c0_23 = arith.constant 0 : index
    %48 = vector.load %arg9[%c1, %c0_23] : memref<2x1024xf32, #tpu.memory_space<vmem>>, vector<1x64xf32>
    tpu.vector_store %arg9[%c1, %c0_23], %47 {strides = array<i32>} : memref<2x1024xf32, #tpu.memory_space<vmem>>, vector<1x64xf32>,
    %49 = vector.extract_strided_slice %14 {offsets = [1, 64], sizes = [1, 64], strides = [1, 1]} : vector<16x128xf32> to vector<1x64xf32>
    %c1_24 = arith.constant 1 : index
    %c64_25 = arith.constant 64 : index
    %50 = vector.load %arg9[%c1_24, %c64_25] : memref<2x1024xf32, #tpu.memory_space<vmem>>, vector<1x64xf32>
    tpu.vector_store %arg9[%c1_24, %c64_25], %49 {strides = array<i32>} : memref<2x1024xf32, #tpu.memory_space<vmem>>, vector<1x64xf32>,
    %51 = vector.extract_strided_slice %14 {offsets = [2, 64], sizes = [1, 64], strides = [1, 1]} : vector<16x128xf32> to vector<1x64xf32>
    %c1_26 = arith.constant 1 : index
    %c128_27 = arith.constant 128 : index
    %52 = vector.load %arg9[%c1_26, %c128_27] : memref<2x1024xf32, #tpu.memory_space<vmem>>, vector<1x64xf32>
    tpu.vector_store %arg9[%c1_26, %c128_27], %51 {strides = array<i32>} : memref<2x1024xf32, #tpu.memory_space<vmem>>, vector<1x64xf32>,
    %53 = vector.extract_strided_slice %14 {offsets = [3, 64], sizes = [1, 64], strides = [1, 1]} : vector<16x128xf32> to vector<1x64xf32>
    %c1_28 = arith.constant 1 : index
    %c192_29 = arith.constant 192 : index
    %54 = vector.load %arg9[%c1_28, %c192_29] : memref<2x1024xf32, #tpu.memory_space<vmem>>, vector<1x64xf32>
    tpu.vector_store %arg9[%c1_28, %c192_29], %53 {strides = array<i32>} : memref<2x1024xf32, #tpu.memory_space<vmem>>, vector<1x64xf32>,
    %55 = vector.extract_strided_slice %14 {offsets = [4, 64], sizes = [1, 64], strides = [1, 1]} : vector<16x128xf32> to vector<1x64xf32>
    %c1_30 = arith.constant 1 : index
    %c256_31 = arith.constant 256 : index
    %56 = vector.load %arg9[%c1_30, %c256_31] : memref<2x1024xf32, #tpu.memory_space<vmem>>, vector<1x64xf32>
    tpu.vector_store %arg9[%c1_30, %c256_31], %55 {strides = array<i32>} : memref<2x1024xf32, #tpu.memory_space<vmem>>, vector<1x64xf32>,
    %57 = vector.extract_strided_slice %14 {offsets = [5, 64], sizes = [1, 64], strides = [1, 1]} : vector<16x128xf32> to vector<1x64xf32>
    %c1_32 = arith.constant 1 : index
    %c320_33 = arith.constant 320 : index
    %58 = vector.load %arg9[%c1_32, %c320_33] : memref<2x1024xf32, #tpu.memory_space<vmem>>, vector<1x64xf32>
    tpu.vector_store %arg9[%c1_32, %c320_33], %57 {strides = array<i32>} : memref<2x1024xf32, #tpu.memory_space<vmem>>, vector<1x64xf32>,
    %59 = vector.extract_strided_slice %14 {offsets = [6, 64], sizes = [1, 64], strides = [1, 1]} : vector<16x128xf32> to vector<1x64xf32>
    %c1_34 = arith.constant 1 : index
    %c384_35 = arith.constant 384 : index
    %60 = vector.load %arg9[%c1_34, %c384_35] : memref<2x1024xf32, #tpu.memory_space<vmem>>, vector<1x64xf32>
    tpu.vector_store %arg9[%c1_34, %c384_35], %59 {strides = array<i32>} : memref<2x1024xf32, #tpu.memory_space<vmem>>, vector<1x64xf32>,
    %61 = vector.extract_strided_slice %14 {offsets = [7, 64], sizes = [1, 64], strides = [1, 1]} : vector<16x128xf32> to vector<1x64xf32>
    %c1_36 = arith.constant 1 : index
    %c448_37 = arith.constant 448 : index
    %62 = vector.load %arg9[%c1_36, %c448_37] : memref<2x1024xf32, #tpu.memory_space<vmem>>, vector<1x64xf32>
    tpu.vector_store %arg9[%c1_36, %c448_37], %61 {strides = array<i32>} : memref<2x1024xf32, #tpu.memory_space<vmem>>, vector<1x64xf32>,
    %63 = vector.extract_strided_slice %14 {offsets = [8, 64], sizes = [1, 64], strides = [1, 1]} : vector<16x128xf32> to vector<1x64xf32>
    %c1_38 = arith.constant 1 : index
    %c512_39 = arith.constant 512 : index
    %64 = vector.load %arg9[%c1_38, %c512_39] : memref<2x1024xf32, #tpu.memory_space<vmem>>, vector<1x64xf32>
    tpu.vector_store %arg9[%c1_38, %c512_39], %63 {strides = array<i32>} : memref<2x1024xf32, #tpu.memory_space<vmem>>, vector<1x64xf32>,
    %65 = vector.extract_strided_slice %14 {offsets = [9, 64], sizes = [1, 64], strides = [1, 1]} : vector<16x128xf32> to vector<1x64xf32>
    %c1_40 = arith.constant 1 : index
    %c576_41 = arith.constant 576 : index
    %66 = vector.load %arg9[%c1_40, %c576_41] : memref<2x1024xf32, #tpu.memory_space<vmem>>, vector<1x64xf32>
    tpu.vector_store %arg9[%c1_40, %c576_41], %65 {strides = array<i32>} : memref<2x1024xf32, #tpu.memory_space<vmem>>, vector<1x64xf32>,
    %67 = vector.extract_strided_slice %14 {offsets = [10, 64], sizes = [1, 64], strides = [1, 1]} : vector<16x128xf32> to vector<1x64xf32>
    %c1_42 = arith.constant 1 : index
    %c640_43 = arith.constant 640 : index
    %68 = vector.load %arg9[%c1_42, %c640_43] : memref<2x1024xf32, #tpu.memory_space<vmem>>, vector<1x64xf32>
    tpu.vector_store %arg9[%c1_42, %c640_43], %67 {strides = array<i32>} : memref<2x1024xf32, #tpu.memory_space<vmem>>, vector<1x64xf32>,
    %69 = vector.extract_strided_slice %14 {offsets = [11, 64], sizes = [1, 64], strides = [1, 1]} : vector<16x128xf32> to vector<1x64xf32>
    %c1_44 = arith.constant 1 : index
    %c704_45 = arith.constant 704 : index
    %70 = vector.load %arg9[%c1_44, %c704_45] : memref<2x1024xf32, #tpu.memory_space<vmem>>, vector<1x64xf32>
    tpu.vector_store %arg9[%c1_44, %c704_45], %69 {strides = array<i32>} : memref<2x1024xf32, #tpu.memory_space<vmem>>, vector<1x64xf32>,
    %71 = vector.extract_strided_slice %14 {offsets = [12, 64], sizes = [1, 64], strides = [1, 1]} : vector<16x128xf32> to vector<1x64xf32>
    %c1_46 = arith.constant 1 : index
    %c768_47 = arith.constant 768 : index
    %72 = vector.load %arg9[%c1_46, %c768_47] : memref<2x1024xf32, #tpu.memory_space<vmem>>, vector<1x64xf32>
    tpu.vector_store %arg9[%c1_46, %c768_47], %71 {strides = array<i32>} : memref<2x1024xf32, #tpu.memory_space<vmem>>, vector<1x64xf32>,
    %73 = vector.extract_strided_slice %14 {offsets = [13, 64], sizes = [1, 64], strides = [1, 1]} : vector<16x128xf32> to vector<1x64xf32>
    %c1_48 = arith.constant 1 : index
    %c832_49 = arith.constant 832 : index
    %74 = vector.load %arg9[%c1_48, %c832_49] : memref<2x1024xf32, #tpu.memory_space<vmem>>, vector<1x64xf32>
    tpu.vector_store %arg9[%c1_48, %c832_49], %73 {strides = array<i32>} : memref<2x1024xf32, #tpu.memory_space<vmem>>, vector<1x64xf32>,
    %75 = vector.extract_strided_slice %14 {offsets = [14, 64], sizes = [1, 64], strides = [1, 1]} : vector<16x128xf32> to vector<1x64xf32>
    %c1_50 = arith.constant 1 : index
    %c896_51 = arith.constant 896 : index
    %76 = vector.load %arg9[%c1_50, %c896_51] : memref<2x1024xf32, #tpu.memory_space<vmem>>, vector<1x64xf32>
    tpu.vector_store %arg9[%c1_50, %c896_51], %75 {strides = array<i32>} : memref<2x1024xf32, #tpu.memory_space<vmem>>, vector<1x64xf32>,
    %77 = vector.extract_strided_slice %14 {offsets = [15, 64], sizes = [1, 64], strides = [1, 1]} : vector<16x128xf32> to vector<1x64xf32>
    %c1_52 = arith.constant 1 : index
    %c960_53 = arith.constant 960 : index
    %78 = vector.load %arg9[%c1_52, %c960_53] : memref<2x1024xf32, #tpu.memory_space<vmem>>, vector<1x64xf32>
    tpu.vector_store %arg9[%c1_52, %c960_53], %77 {strides = array<i32>} : memref<2x1024xf32, #tpu.memory_space<vmem>>, vector<1x64xf32>,
    %c0_54 = arith.constant 0 : index
    %c0_55 = arith.constant 0 : index
    %79 = vector.load %arg9[%c0_54, %c0_55] : memref<2x1024xf32, #tpu.memory_space<vmem>>, vector<2x1024xf32>
    %80 = arith.truncf %79 : vector<2x1024xf32> to vector<2x1024xbf16>
    %c0_56 = arith.constant 0 : index
    %c0_57 = arith.constant 0 : index
    %81 = vector.load %arg4[%c0_56, %c0_57] : memref<1024x64xbf16, #tpu.memory_space<vmem>>, vector<1024x64xbf16>
    %cst_58 = arith.constant dense<0.000000e+00> : vector<2x64xf32>
    %82 = tpu.matmul %80, %81, %cst_58 {dimension_numbers = #tpu.dot_dimension_numbers<[1], [0], [0], [1], [0, 0, 1, 1], [], []>} : vector<2x1024xbf16>, vector<1024x64xbf16>, vector<2x64xf32> -> vector<2x64xf32>
    %c0_59 = arith.constant 0 : index
    %c0_60 = arith.constant 0 : index
    %83 = vector.load %arg5[%c0_59, %c0_60] : memref<1x64xf32, #tpu.memory_space<vmem>>, vector<1x64xf32>
    %84 = vector.broadcast %83 : vector<1x64xf32> to vector<2x64xf32>
    %85 = arith.addf %82, %84 : vector<2x64xf32>
    %cst_61 = arith.constant 0.000000e+00 : f32
    %86 = vector.broadcast %cst_61 : f32 to vector<2x64xf32>
    %87 = arith.maximumf %85, %86 : vector<2x64xf32>
    %88 = arith.truncf %87 : vector<2x64xf32> to vector<2x64xbf16>
    %c0_62 = arith.constant 0 : index
    %c0_63 = arith.constant 0 : index
    %89 = vector.load %arg6[%c0_62, %c0_63] : memref<64x128xbf16, #tpu.memory_space<vmem>>, vector<64x128xbf16>
    %cst_64 = arith.constant dense<0.000000e+00> : vector<2x128xf32>
    %90 = tpu.matmul %88, %89, %cst_64 {dimension_numbers = #tpu.dot_dimension_numbers<[1], [0], [0], [1], [0, 0, 1, 1], [], []>} : vector<2x64xbf16>, vector<64x128xbf16>, vector<2x128xf32> -> vector<2x128xf32>
    %c0_65 = arith.constant 0 : index
    %c0_66 = arith.constant 0 : index
    %91 = vector.load %arg7[%c0_65, %c0_66] : memref<1x128xf32, #tpu.memory_space<vmem>>, vector<1x128xf32>
    %92 = vector.broadcast %91 : vector<1x128xf32> to vector<2x128xf32>
    %93 = arith.addf %90, %92 : vector<2x128xf32>
    %c0_67 = arith.constant 0 : index
    %c0_68 = arith.constant 0 : index
    %94 = vector.load %arg8[%c0_67, %c0_68] : memref<2x128xf32, #tpu.memory_space<vmem>>, vector<2x128xf32>
    tpu.vector_store %arg8[%c0_67, %c0_68], %93 {strides = array<i32>} : memref<2x128xf32, #tpu.memory_space<vmem>>, vector<2x128xf32>,
    return
  }
  func.func @transform_0(%arg0: i32) -> (i32, i32) {
    %c0_i32 = arith.constant 0 : i32
    %c0_i32_0 = arith.constant 0 : i32
    %c0_i32_1 = arith.constant 0 : i32
    return %c0_i32, %c0_i32_0 : i32, i32
  }
  func.func @transform_1(%arg0: i32) -> (i32, i32) {
    %c0_i32 = arith.constant 0 : i32
    %c0_i32_0 = arith.constant 0 : i32
    %c0_i32_1 = arith.constant 0 : i32
    return %c0_i32, %c0_i32_0 : i32, i32
  }
  func.func @transform_2(%arg0: i32) -> (i32, i32) {
    %c0_i32 = arith.constant 0 : i32
    %c0_i32_0 = arith.constant 0 : i32
    %c0_i32_1 = arith.constant 0 : i32
    return %c0_i32, %c0_i32_0 : i32, i32
  }
  func.func @transform_3(%arg0: i32) -> (i32, i32) {
    %c0_i32 = arith.constant 0 : i32
    %c0_i32_0 = arith.constant 0 : i32
    %c0_i32_1 = arith.constant 0 : i32
    return %c0_i32, %c0_i32_0 : i32, i32
  }
  func.func @transform_4(%arg0: i32) -> (i32, i32) {
    %c0_i32 = arith.constant 0 : i32
    %c0_i32_0 = arith.constant 0 : i32
    %c0_i32_1 = arith.constant 0 : i32
    return %c0_i32, %c0_i32_0 : i32, i32
  }
  func.func @transform_5(%arg0: i32) -> (i32, i32) {
    %c0_i32 = arith.constant 0 : i32
    %c0_i32_0 = arith.constant 0 : i32
    %c0_i32_1 = arith.constant 0 : i32
    return %c0_i32, %c0_i32_0 : i32, i32
  }
  func.func @transform_6(%arg0: i32) -> (i32, i32) {
    %c0_i32 = arith.constant 0 : i32
    %c0_i32_0 = arith.constant 0 : i32
    %c0_i32_1 = arith.constant 0 : i32
    return %c0_i32, %c0_i32_0 : i32, i32
  }
  func.func @transform_7(%arg0: i32) -> (i32, i32) {
    %c0_i32 = arith.constant 0 : i32
    %c0_i32_0 = arith.constant 0 : i32
    %c0_i32_1 = arith.constant 0 : i32
    return %c0_i32, %c0_i32_0 : i32, i32
  }
}

</mosaic_0001>

<llo_original>
// kernel: piano_classifier_forward.2
$region0: #{piano_classifier_forward.2}
  #allocation0 [shape = 'u32[]', space=smem, size = 0x4, offset = 0x4, fixed_abs, tag = 'smem constant byte address 0x4 - core index']
  #allocation1 [shape = 'u32[72,128]{1,0:T(1,128)}', space=vmem, size = 0x9000, scoped, tag = 'internal scratch']
  %s0 = inlined_call_operand.vmem [shape: bf16[9,2048], index: 0, kind: input, shape index: {}]
  %s1 = inlined_call_operand.vmem [shape: bf16[8,9], index: 1, kind: input, shape index: {}]
  %s2 = inlined_call_operand.vmem [shape: f32[8,1], index: 2, kind: input, shape index: {}]
  %s3 = inlined_call_operand.vmem [shape: bf16[8,512], index: 3, kind: output, shape index: {}]
  %s4 = sld [smem:[#allocation0]]
  $region22: #{piano_classifier_forward.2} parent=0
    _
  %s6 = ssub.s32 1, %s4
  %s7 = scalar_select 0, %s6, %s4
  // Predicated region
  $region2: #{piano_classifier_forward.2} parent=0 // pred_check
    _
  $region3: #{piano_classifier_forward.2} parent=0 // pred_check_branch
    %9 = sbr.rel (0) target = $region5
  $region4: #{piano_classifier_forward.2} parent=0 // pred_region
    _
  $region5: #{piano_classifier_forward.2} parent=0 // pred_fallthru
    _
  // Predicated region
  $region6: #{piano_classifier_forward.2} parent=0 // pred_check
    _
  $region7: #{piano_classifier_forward.2} parent=0 // pred_check_branch
    %11 = sbr.rel (0) target = $region9
  $region8: #{piano_classifier_forward.2} parent=0 // pred_region
    _
  $region9: #{piano_classifier_forward.2} parent=0 // pred_fallthru
    _
  // Predicated region
  $region10: #{piano_classifier_forward.2} parent=0 // pred_check
    _
  $region11: #{piano_classifier_forward.2} parent=0 // pred_check_branch
    %13 = sbr.rel (0) target = $region13
  $region12: #{piano_classifier_forward.2} parent=0 // pred_region
    _
  $region13: #{piano_classifier_forward.2} parent=0 // pred_fallthru
    _
  %v15 = vld [vmem:[%s1] sm:$0xf]
  %v16 = vld [vmem:[%s0] sm:$0xff]
  %v17 = vld [vmem:[%s0 + $0x8] sm:$0xff]
  %v18 = vld [vmem:[%s0 + $0x10] sm:$0xff]
  %v19 = vld [vmem:[%s0 + $0x18] sm:$0xff]
  %v20 = vld [vmem:[%s0 + $0x20] sm:$0xff]
  %v21 = vld [vmem:[%s0 + $0x28] sm:$0xff]
  %v22 = vld [vmem:[%s0 + $0x30] sm:$0xff]
  %v23 = vld [vmem:[%s0 + $0x38] sm:$0xff]
  %v24 = vld [vmem:[%s0 + $0x40] sm:$0x11]
  %v25 = vld [vmem:[%s0 + $0x48] sm:$0x11]
  %v26 = vld [vmem:[%s0 + $0x50] sm:$0x11]
  %v27 = vld [vmem:[%s0 + $0x58] sm:$0x11]
  %v28 = vld [vmem:[%s0 + $0x60] sm:$0x11]
  %v29 = vld [vmem:[%s0 + $0x68] sm:$0x11]
  %v30 = vld [vmem:[%s0 + $0x70] sm:$0x11]
  %v31 = vld [vmem:[%s0 + $0x78] sm:$0x11]
  %v48 = vunpack.c.l.b16 %v16
  %v49 = vunpack.c.h.b16 %v16
  %v50 = vunpack.c.l.b16 %v17
  %v51 = vunpack.c.h.b16 %v17
  %v52 = vunpack.c.l.b16 %v18
  %v53 = vunpack.c.h.b16 %v18
  %v54 = vunpack.c.l.b16 %v19
  %v55 = vunpack.c.h.b16 %v19
  %v56 = vunpack.c.l.b16 %v20
  %v57 = vunpack.c.h.b16 %v20
  %v58 = vunpack.c.l.b16 %v21
  %v59 = vunpack.c.h.b16 %v21
  %v60 = vunpack.c.l.b16 %v22
  %v61 = vunpack.c.h.b16 %v22
  %v62 = vunpack.c.l.b16 %v23
  %v63 = vunpack.c.h.b16 %v23
  %v64 = vunpack.c.l.b16 %v24
  %v65 = vunpack.c.h.b16 %v24
  %v66 = vunpack.c.l.b16 %v25
  %v67 = vunpack.c.h.b16 %v25
  %v68 = vunpack.c.l.b16 %v26
  %v69 = vunpack.c.h.b16 %v26
  %v70 = vunpack.c.l.b16 %v27
  %v71 = vunpack.c.h.b16 %v27
  %v72 = vunpack.c.l.b16 %v28
  %v73 = vunpack.c.h.b16 %v28
  %v74 = vunpack.c.l.b16 %v29
  %v75 = vunpack.c.h.b16 %v29
  %v76 = vunpack.c.l.b16 %v30
  %v77 = vunpack.c.h.b16 %v30
  %v78 = vunpack.c.l.b16 %v31
  %v79 = vunpack.c.h.b16 %v31
  %v80 = vpack.c.b16 %v64, %v48
  %v81 = vpack.c.b16 %v65, %v49
  %v82 = vpack.c.b16 %v66, %v50
  %v83 = vpack.c.b16 %v67, %v51
  %v84 = vpack.c.b16 %v68, %v52
  %v85 = vpack.c.b16 %v69, %v53
  %v86 = vpack.c.b16 %v70, %v54
  %v87 = vpack.c.b16 %v71, %v55
  %v88 = vpack.c.b16 %v72, %v56
  %v89 = vpack.c.b16 %v73, %v57
  %v90 = vpack.c.b16 %v74, %v58
  %v91 = vpack.c.b16 %v75, %v59
  %v92 = vpack.c.b16 %v76, %v60
  %v93 = vpack.c.b16 %v77, %v61
  %v94 = vpack.c.b16 %v78, %v62
  %v95 = vpack.c.b16 %v79, %v63
  %vm96 = vcmask 72704
  %v98 = vsel %vm96, %v15, 0
  %vm100 = vcmask 1043456
  %vm101 = vcmask 1044480
  %v102 = vsel %vm100, 4294967295, 65535
  %v103 = vsel %vm101, %v102, 0
  %v105 = vand.u32 %v80, %v103
  %v108 = vand.u32 %v81, %v103
  %v111 = vand.u32 %v82, %v103
  %v114 = vand.u32 %v83, %v103
  %v117 = vand.u32 %v84, %v103
  %v120 = vand.u32 %v85, %v103
  %v123 = vand.u32 %v86, %v103
  %v126 = vand.u32 %v87, %v103
  %v129 = vand.u32 %v88, %v103
  %v132 = vand.u32 %v89, %v103
  %v135 = vand.u32 %v90, %v103
  %v138 = vand.u32 %v91, %v103
  %v141 = vand.u32 %v92, %v103
  %v144 = vand.u32 %v93, %v103
  %v147 = vand.u32 %v94, %v103
  %v150 = vand.u32 %v95, %v103
  %152 = vmatpush.bf16.msra.mxu0 0
  %153 = vmatpush.bf16.msra.mxu0 0
  %154 = vmatpush.bf16.msra.mxu0 0
  %155 = vmatpush.bf16.msra.mxu0 0
  %156 = vmatpush.bf16.msra.mxu0 0
  %157 = vmatpush.bf16.msra.mxu0 0
  %158 = vmatpush.bf16.msra.mxu0 0
  %159 = vmatpush.bf16.msra.mxu0 %v105
  %160 = vmatmul.bf16.gmra.mxu0 %v98
  %v161 = vpop.f32.mrf.mxu0
  %v162 = vadd.f32 0.0, %v161
  %v163 = vpop.f32.mrf.mxu0
  %164 = vdwg.mxu0
  %165 = vmatpush.bf16.msra.mxu0 0
  %166 = vmatpush.bf16.msra.mxu0 0
  %167 = vmatpush.bf16.msra.mxu0 0
  %168 = vmatpush.bf16.msra.mxu0 0
  %169 = vmatpush.bf16.msra.mxu0 0
  %170 = vmatpush.bf16.msra.mxu0 0
  %171 = vmatpush.bf16.msra.mxu0 0
  %172 = vmatpush.bf16.msra.mxu0 %v108
  %173 = vmatmul.bf16.gmra.mxu0 %v98
  %v174 = vpop.f32.mrf.mxu0
  %v175 = vadd.f32 0.0, %v174
  %v176 = vpop.f32.mrf.mxu0
  %177 = vdwg.mxu0
  %178 = vmatpush.bf16.msra.mxu0 0
  %179 = vmatpush.bf16.msra.mxu0 0
  %180 = vmatpush.bf16.msra.mxu0 0
  %181 = vmatpush.bf16.msra.mxu0 0
  %182 = vmatpush.bf16.msra.mxu0 0
  %183 = vmatpush.bf16.msra.mxu0 0
  %184 = vmatpush.bf16.msra.mxu0 0
  %185 = vmatpush.bf16.msra.mxu0 %v111
  %186 = vmatmul.bf16.gmra.mxu0 %v98
  %v187 = vpop.f32.mrf.mxu0
  %v188 = vadd.f32 0.0, %v187
  %v189 = vpop.f32.mrf.mxu0
  %190 = vdwg.mxu0
  %191 = vmatpush.bf16.msra.mxu0 0
  %192 = vmatpush.bf16.msra.mxu0 0
  %193 = vmatpush.bf16.msra.mxu0 0
  %194 = vmatpush.bf16.msra.mxu0 0
  %195 = vmatpush.bf16.msra.mxu0 0
  %196 = vmatpush.bf16.msra.mxu0 0
  %197 = vmatpush.bf16.msra.mxu0 0
  %198 = vmatpush.bf16.msra.mxu0 %v114
  %199 = vmatmul.bf16.gmra.mxu0 %v98
  %v200 = vpop.f32.mrf.mxu0
  %v201 = vadd.f32 0.0, %v200
  %v202 = vpop.f32.mrf.mxu0
  %203 = vdwg.mxu0
  %204 = vmatpush.bf16.msra.mxu0 0
  %205 = vmatpush.bf16.msra.mxu0 0
  %206 = vmatpush.bf16.msra.mxu0 0
  %207 = vmatpush.bf16.msra.mxu0 0
  %208 = vmatpush.bf16.msra.mxu0 0
  %209 = vmatpush.bf16.msra.mxu0 0
  %210 = vmatpush.bf16.msra.mxu0 0
  %211 = vmatpush.bf16.msra.mxu0 %v117
  %212 = vmatmul.bf16.gmra.mxu0 %v98
  %v213 = vpop.f32.mrf.mxu0
  %v214 = vadd.f32 0.0, %v213
  %v215 = vpop.f32.mrf.mxu0
  %216 = vdwg.mxu0
  %217 = vmatpush.bf16.msra.mxu0 0
  %218 = vmatpush.bf16.msra.mxu0 0
  %219 = vmatpush.bf16.msra.mxu0 0
  %220 = vmatpush.bf16.msra.mxu0 0
  %221 = vmatpush.bf16.msra.mxu0 0
  %222 = vmatpush.bf16.msra.mxu0 0
  %223 = vmatpush.bf16.msra.mxu0 0
  %224 = vmatpush.bf16.msra.mxu0 %v120
  %225 = vmatmul.bf16.gmra.mxu0 %v98
  %v226 = vpop.f32.mrf.mxu0
  %v227 = vadd.f32 0.0, %v226
  %v228 = vpop.f32.mrf.mxu0
  %229 = vdwg.mxu0
  %230 = vmatpush.bf16.msra.mxu0 0
  %231 = vmatpush.bf16.msra.mxu0 0
  %232 = vmatpush.bf16.msra.mxu0 0
  %233 = vmatpush.bf16.msra.mxu0 0
  %234 = vmatpush.bf16.msra.mxu0 0
  %235 = vmatpush.bf16.msra.mxu0 0
  %236 = vmatpush.bf16.msra.mxu0 0
  %237 = vmatpush.bf16.msra.mxu0 %v123
  %238 = vmatmul.bf16.gmra.mxu0 %v98
  %v239 = vpop.f32.mrf.mxu0
  %v240 = vadd.f32 0.0, %v239
  %v241 = vpop.f32.mrf.mxu0
  %242 = vdwg.mxu0
  %243 = vmatpush.bf16.msra.mxu0 0
  %244 = vmatpush.bf16.msra.mxu0 0
  %245 = vmatpush.bf16.msra.mxu0 0
  %246 = vmatpush.bf16.msra.mxu0 0
  %247 = vmatpush.bf16.msra.mxu0 0
  %248 = vmatpush.bf16.msra.mxu0 0
  %249 = vmatpush.bf16.msra.mxu0 0
  %250 = vmatpush.bf16.msra.mxu0 %v126
  %251 = vmatmul.bf16.gmra.mxu0 %v98
  %v252 = vpop.f32.mrf.mxu0
  %v253 = vadd.f32 0.0, %v252
  %v254 = vpop.f32.mrf.mxu0
  %255 = vdwg.mxu0
  %256 = vmatpush.bf16.msra.mxu0 0
  %257 = vmatpush.bf16.msra.mxu0 0
  %258 = vmatpush.bf16.msra.mxu0 0
  %259 = vmatpush.bf16.msra.mxu0 0
  %260 = vmatpush.bf16.msra.mxu0 0
  %261 = vmatpush.bf16.msra.mxu0 0
  %262 = vmatpush.bf16.msra.mxu0 0
  %263 = vmatpush.bf16.msra.mxu0 %v129
  %264 = vmatmul.bf16.gmra.mxu0 %v98
  %v265 = vpop.f32.mrf.mxu0
  %v266 = vadd.f32 0.0, %v265
  %v267 = vpop.f32.mrf.mxu0
  %268 = vdwg.mxu0
  %269 = vmatpush.bf16.msra.mxu0 0
  %270 = vmatpush.bf16.msra.mxu0 0
  %271 = vmatpush.bf16.msra.mxu0 0
  %272 = vmatpush.bf16.msra.mxu0 0
  %273 = vmatpush.bf16.msra.mxu0 0
  %274 = vmatpush.bf16.msra.mxu0 0
  %275 = vmatpush.bf16.msra.mxu0 0
  %276 = vmatpush.bf16.msra.mxu0 %v132
  %277 = vmatmul.bf16.gmra.mxu0 %v98
  %v278 = vpop.f32.mrf.mxu0
  %v279 = vadd.f32 0.0, %v278
  %v280 = vpop.f32.mrf.mxu0
  %281 = vdwg.mxu0
  %282 = vmatpush.bf16.msra.mxu0 0
  %283 = vmatpush.bf16.msra.mxu0 0
  %284 = vmatpush.bf16.msra.mxu0 0
  %285 = vmatpush.bf16.msra.mxu0 0
  %286 = vmatpush.bf16.msra.mxu0 0
  %287 = vmatpush.bf16.msra.mxu0 0
  %288 = vmatpush.bf16.msra.mxu0 0
  %289 = vmatpush.bf16.msra.mxu0 %v135
  %290 = vmatmul.bf16.gmra.mxu0 %v98
  %v291 = vpop.f32.mrf.mxu0
  %v292 = vadd.f32 0.0, %v291
  %v293 = vpop.f32.mrf.mxu0
  %294 = vdwg.mxu0
  %295 = vmatpush.bf16.msra.mxu0 0
  %296 = vmatpush.bf16.msra.mxu0 0
  %297 = vmatpush.bf16.msra.mxu0 0
  %298 = vmatpush.bf16.msra.mxu0 0
  %299 = vmatpush.bf16.msra.mxu0 0
  %300 = vmatpush.bf16.msra.mxu0 0
  %301 = vmatpush.bf16.msra.mxu0 0
  %302 = vmatpush.bf16.msra.mxu0 %v138
  %303 = vmatmul.bf16.gmra.mxu0 %v98
  %v304 = vpop.f32.mrf.mxu0
  %v305 = vadd.f32 0.0, %v304
  %v306 = vpop.f32.mrf.mxu0
  %307 = vdwg.mxu0
  %308 = vmatpush.bf16.msra.mxu0 0
  %309 = vmatpush.bf16.msra.mxu0 0
  %310 = vmatpush.bf16.msra.mxu0 0
  %311 = vmatpush.bf16.msra.mxu0 0
  %312 = vmatpush.bf16.msra.mxu0 0
  %313 = vmatpush.bf16.msra.mxu0 0
  %314 = vmatpush.bf16.msra.mxu0 0
  %315 = vmatpush.bf16.msra.mxu0 %v141
  %316 = vmatmul.bf16.gmra.mxu0 %v98
  %v317 = vpop.f32.mrf.mxu0
  %v318 = vadd.f32 0.0, %v317
  %v319 = vpop.f32.mrf.mxu0
  %320 = vdwg.mxu0
  %321 = vmatpush.bf16.msra.mxu0 0
  %322 = vmatpush.bf16.msra.mxu0 0
  %323 = vmatpush.bf16.msra.mxu0 0
  %324 = vmatpush.bf16.msra.mxu0 0
  %325 = vmatpush.bf16.msra.mxu0 0
  %326 = vmatpush.bf16.msra.mxu0 0
  %327 = vmatpush.bf16.msra.mxu0 0
  %328 = vmatpush.bf16.msra.mxu0 %v144
  %329 = vmatmul.bf16.gmra.mxu0 %v98
  %v330 = vpop.f32.mrf.mxu0
  %v331 = vadd.f32 0.0, %v330
  %v332 = vpop.f32.mrf.mxu0
  %333 = vdwg.mxu0
  %334 = vmatpush.bf16.msra.mxu0 0
  %335 = vmatpush.bf16.msra.mxu0 0
  %336 = vmatpush.bf16.msra.mxu0 0
  %337 = vmatpush.bf16.msra.mxu0 0
  %338 = vmatpush.bf16.msra.mxu0 0
  %339 = vmatpush.bf16.msra.mxu0 0
  %340 = vmatpush.bf16.msra.mxu0 0
  %341 = vmatpush.bf16.msra.mxu0 %v147
  %342 = vmatmul.bf16.gmra.mxu0 %v98
  %v343 = vpop.f32.mrf.mxu0
  %v344 = vadd.f32 0.0, %v343
  %v345 = vpop.f32.mrf.mxu0
  %346 = vdwg.mxu0
  %347 = vmatpush.bf16.msra.mxu0 0
  %348 = vmatpush.bf16.msra.mxu0 0
  %349 = vmatpush.bf16.msra.mxu0 0
  %350 = vmatpush.bf16.msra.mxu0 0
  %351 = vmatpush.bf16.msra.mxu0 0
  %352 = vmatpush.bf16.msra.mxu0 0
  %353 = vmatpush.bf16.msra.mxu0 0
  %354 = vmatpush.bf16.msra.mxu0 %v150
  %355 = vmatmul.bf16.gmra.mxu0 %v98
  %v356 = vpop.f32.mrf.mxu0
  %v357 = vadd.f32 0.0, %v356
  %v358 = vpop.f32.mrf.mxu0
  %359 = vdwg.mxu0
  %v360 = vmax.f32 %v162, %v214
  %v361 = vmax.f32 %v175, %v227
  %v362 = vmax.f32 %v188, %v240
  %v363 = vmax.f32 %v201, %v253
  %v364 = vmax.f32 %v266, %v318
  %v365 = vmax.f32 %v279, %v331
  %v366 = vmax.f32 %v292, %v344
  %v367 = vmax.f32 %v305, %v357
  %v368 = vmax.f32 %v360, %v364
  %v369 = vmax.f32 %v361, %v365
  %v370 = vmax.f32 %v362, %v366
  %v371 = vmax.f32 %v363, %v367
  %v372 = vld [vmem:[%s2] sm:$0xff]
  %374 = vset.pattern.permute.xlu0 0
  %375 = vperm.xlu0 %374, %v372
  %v376 = vpop.permute.xlu0 %375
  %v378 = vadd.f32 %v368, %v376
  %v379 = vadd.f32 %v369, %v376
  %v380 = vadd.f32 %v370, %v376
  %v381 = vadd.f32 %v371, %v376
  %v382 = vmax.f32 %v378, 0.0
  %v383 = vmax.f32 %v379, 0.0
  %v384 = vmax.f32 %v380, 0.0
  %v385 = vmax.f32 %v381, 0.0
  %v386 = vpack.c.bf16 %v383, %v382
  %v387 = vpack.c.bf16 %v385, %v384
  %388 = vst [vmem:[%s3] sm:$0xff] %v386
  %389 = vst [vmem:[%s3 + $0x8] sm:$0xff] %v387
  // Predicated region
  $region14: #{piano_classifier_forward.2} parent=0 // pred_check
    _
  $region15: #{piano_classifier_forward.2} parent=0 // pred_check_branch
    %391 = sbr.rel (0) target = $region17
  $region16: #{piano_classifier_forward.2} parent=0 // pred_region
    _
  $region17: #{piano_classifier_forward.2} parent=0 // pred_fallthru
    _
  // Predicated region
  $region18: #{piano_classifier_forward.2} parent=0 // pred_check
    _
  $region19: #{piano_classifier_forward.2} parent=0 // pred_check_branch
    %393 = sbr.rel (0) target = $region21
  $region20: #{piano_classifier_forward.2} parent=0 // pred_region
    _
  $region21: #{piano_classifier_forward.2} parent=0 // pred_fallthru
    _

// kernel: piano_classifier_forward.3
$region0: #{piano_classifier_forward.3}
  #allocation0 [shape = 'u32[]', space=smem, size = 0x4, offset = 0x4, fixed_abs, tag = 'smem constant byte address 0x4 - core index']
  #allocation1 [shape = 'u32[72,128]{1,0:T(1,128)}', space=vmem, size = 0x9000, scoped, tag = 'internal scratch']
  #allocation2 [shape = 'f32[2,1024]{1,0:T(2,128)}', space=vmem, size = 0x2000, scoped, tag = 'scratch operand']
  %s0 = inlined_call_operand.vmem [shape: bf16[72,512], index: 0, kind: input, shape index: {}]
  %s1 = inlined_call_operand.vmem [shape: bf16[16,72], index: 1, kind: input, shape index: {}]
  %s2 = inlined_call_operand.vmem [shape: f32[16,1], index: 2, kind: input, shape index: {}]
  %s3 = inlined_call_operand.vmem [shape: bf16[1024,64], index: 3, kind: input, shape index: {}]
  %s4 = inlined_call_operand.vmem [shape: f32[1,64], index: 4, kind: input, shape index: {}]
  %s5 = inlined_call_operand.vmem [shape: bf16[64,128], index: 5, kind: input, shape index: {}]
  %s6 = inlined_call_operand.vmem [shape: f32[1,128], index: 6, kind: input, shape index: {}]
  %s7 = inlined_call_operand.hbm [shape: f32[2,128], index: 7, kind: output, shape index: {}]
  %s8 = sld [smem:[#allocation0]]
  $region38: #{piano_classifier_forward.3} parent=0
    _
  %s10 = ssub.s32 1, %s8
  %s11 = scalar_select 0, %s10, %s8
  $region1: #{piano_classifier_forward.3} parent=0
    #allocation3 [shape = 'u8[1024]{0}', space=vmem, size = 0x400, scoped, tag = 'output window, operand 0, single buffered']
    #allocation4 [shape = 's32[1]{0}', space=sflag, size = 0x4, scoped, tag = 'scoped memory for piano_classifier_forward.3']
    %12 = vsyncpa [#allocation4], 0
    // Predicated region
    $region2: #{piano_classifier_forward.3} parent=1 // pred_check
      _
    $region3: #{piano_classifier_forward.3} parent=1 // pred_check_branch
      %14 = sbr.rel (0) target = $region5
    $region4: #{piano_classifier_forward.3} parent=1 // pred_region
      _
    $region5: #{piano_classifier_forward.3} parent=1 // pred_fallthru
      _
    // Predicated region
    $region6: #{piano_classifier_forward.3} parent=1 // pred_check
      _
    $region7: #{piano_classifier_forward.3} parent=1 // pred_check_branch
      %16 = sbr.rel (0) target = $region9
    $region8: #{piano_classifier_forward.3} parent=1 // pred_region
      _
    $region9: #{piano_classifier_forward.3} parent=1 // pred_fallthru
      _
    // Predicated region
    $region10: #{piano_classifier_forward.3} parent=1 // pred_check
      _
    $region11: #{piano_classifier_forward.3} parent=1 // pred_check_branch
      %18 = sbr.rel (0) target = $region13
    $region12: #{piano_classifier_forward.3} parent=1 // pred_region
      _
    $region13: #{piano_classifier_forward.3} parent=1 // pred_fallthru
      _
    // Predicated region
    $region14: #{piano_classifier_forward.3} parent=1 // pred_check
      _
    $region15: #{piano_classifier_forward.3} parent=1 // pred_check_branch
      %20 = sbr.rel (0) target = $region17
    $region16: #{piano_classifier_forward.3} parent=1 // pred_region
      _
    $region17: #{piano_classifier_forward.3} parent=1 // pred_fallthru
      _
    // Predicated region
    $region18: #{piano_classifier_forward.3} parent=1 // pred_check
      _
    $region19: #{piano_classifier_forward.3} parent=1 // pred_check_branch
      %22 = sbr.rel (0) target = $region21
    $region20: #{piano_classifier_forward.3} parent=1 // pred_region
      _
    $region21: #{piano_classifier_forward.3} parent=1 // pred_fallthru
      _
    // Predicated region
    $region22: #{piano_classifier_forward.3} parent=1 // pred_check
      _
    $region23: #{piano_classifier_forward.3} parent=1 // pred_check_branch
      %24 = sbr.rel (0) target = $region25
    $region24: #{piano_classifier_forward.3} parent=1 // pred_region
      _
    $region25: #{piano_classifier_forward.3} parent=1 // pred_fallthru
      _
    // Predicated region
    $region26: #{piano_classifier_forward.3} parent=1 // pred_check
      _
    $region27: #{piano_classifier_forward.3} parent=1 // pred_check_branch
      %26 = sbr.rel (0) target = $region29
    $region28: #{piano_classifier_forward.3} parent=1 // pred_region
      _
    $region29: #{piano_classifier_forward.3} parent=1 // pred_fallthru
      _
    %v28 = vld [vmem:[%s1] sm:$0xf]
    %v29 = vld [vmem:[%s1 + $0x4] sm:$0xf]
    %v30 = vld [vmem:[%s0] sm:$0xff]
    %v31 = vld [vmem:[%s0 + $0x8] sm:$0xff]
    %v32 = vld [vmem:[%s0 + $0x10] sm:$0xff]
    %v33 = vld [vmem:[%s0 + $0x18] sm:$0xff]
    %v34 = vld [vmem:[%s0 + $0x20] sm:$0xff]
    %v35 = vld [vmem:[%s0 + $0x28] sm:$0xff]
    %v36 = vld [vmem:[%s0 + $0x30] sm:$0xff]
    %v37 = vld [vmem:[%s0 + $0x38] sm:$0xff]
    %v38 = vld [vmem:[%s0 + $0x40] sm:$0xff]
    %v39 = vld [vmem:[%s0 + $0x48] sm:$0xff]
    %v40 = vld [vmem:[%s0 + $0x50] sm:$0xff]
    %v41 = vld [vmem:[%s0 + $0x58] sm:$0xff]
    %v42 = vld [vmem:[%s0 + $0x60] sm:$0xff]
    %v43 = vld [vmem:[%s0 + $0x68] sm:$0xff]
    %v44 = vld [vmem:[%s0 + $0x70] sm:$0xff]
    %v45 = vld [vmem:[%s0 + $0x78] sm:$0xff]
    %v46 = vld [vmem:[%s0 + $0x80] sm:$0xff]
    %v47 = vld [vmem:[%s0 + $0x88] sm:$0xff]
    %v50 = vunpack.c.l.b16 %v28
    %v51 = vunpack.c.l.b16 %v29
    %v52 = vpack.c.b16 %v51, %v50
    %v71 = vunpack.c.l.b16 %v30
    %v72 = vunpack.c.h.b16 %v30
    %v73 = vunpack.c.l.b16 %v31
    %v74 = vunpack.c.h.b16 %v31
    %v75 = vunpack.c.l.b16 %v32
    %v76 = vunpack.c.h.b16 %v32
    %v77 = vunpack.c.l.b16 %v33
    %v78 = vunpack.c.h.b16 %v33
    %v79 = vunpack.c.l.b16 %v34
    %v80 = vunpack.c.h.b16 %v34
    %v81 = vunpack.c.l.b16 %v35
    %v82 = vunpack.c.h.b16 %v35
    %v83 = vunpack.c.l.b16 %v36
    %v84 = vunpack.c.h.b16 %v36
    %v85 = vunpack.c.l.b16 %v37
    %v86 = vunpack.c.h.b16 %v37
    %v87 = vunpack.c.l.b16 %v38
    %v88 = vunpack.c.h.b16 %v38
    %v89 = vunpack.c.l.b16 %v39
    %v90 = vunpack.c.h.b16 %v39
    %v91 = vunpack.c.l.b16 %v40
    %v92 = vunpack.c.h.b16 %v40
    %v93 = vunpack.c.l.b16 %v41
    %v94 = vunpack.c.h.b16 %v41
    %v95 = vunpack.c.l.b16 %v42
    %v96 = vunpack.c.h.b16 %v42
    %v97 = vunpack.c.l.b16 %v43
    %v98 = vunpack.c.h.b16 %v43
    %v99 = vunpack.c.l.b16 %v44
    %v100 = vunpack.c.h.b16 %v44
    %v101 = vunpack.c.l.b16 %v45
    %v102 = vunpack.c.h.b16 %v45
    %v103 = vunpack.c.l.b16 %v46
    %v104 = vunpack.c.h.b16 %v46
    %v105 = vunpack.c.l.b16 %v47
    %v106 = vunpack.c.h.b16 %v47
    %v107 = vpack.c.b16 %v75, %v71
    %v108 = vpack.c.b16 %v76, %v72
    %v109 = vpack.c.b16 %v77, %v73
    %v110 = vpack.c.b16 %v78, %v74
    %v111 = vpack.c.b16 %v83, %v79
    %v112 = vpack.c.b16 %v84, %v80
    %v113 = vpack.c.b16 %v85, %v81
    %v114 = vpack.c.b16 %v86, %v82
    %v115 = vpack.c.b16 %v91, %v87
    %v116 = vpack.c.b16 %v92, %v88
    %v117 = vpack.c.b16 %v93, %v89
    %v118 = vpack.c.b16 %v94, %v90
    %v119 = vpack.c.b16 %v99, %v95
    %v120 = vpack.c.b16 %v100, %v96
    %v121 = vpack.c.b16 %v101, %v97
    %v122 = vpack.c.b16 %v102, %v98
    %v123 = vpack.c.b16 %v103, %v103
    %v124 = vpack.c.b16 %v104, %v104
    %v125 = vpack.c.b16 %v105, %v105
    %v126 = vpack.c.b16 %v106, %v106
    %vm143 = vcmask 588800
    %v145 = vsel %vm143, %v52, 0
    %vm147 = vcmask 1043456
    %v149 = vsel %vm147, %v123, 0
    %v152 = vsel %vm147, %v124, 0
    %v155 = vsel %vm147, %v125, 0
    %v158 = vsel %vm147, %v126, 0
    %160 = vmatpush.bf16.msra.mxu0 0
    %161 = vmatpush.bf16.msra.mxu0 0
    %162 = vmatpush.bf16.msra.mxu0 0
    %163 = vmatpush.bf16.msra.mxu0 %v149
    %164 = vmatpush.bf16.msra.mxu0 %v119
    %165 = vmatpush.bf16.msra.mxu0 %v115
    %166 = vmatpush.bf16.msra.mxu0 %v111
    %167 = vmatpush.bf16.msra.mxu0 %v107
    %168 = vmatmul.bf16.gmra.mxu0 %v145
    %v169 = vpop.f32.mrf.mxu0
    %v170 = vadd.f32 0.0, %v169
    %v171 = vpop.f32.mrf.mxu0
    %v172 = vadd.f32 0.0, %v171
    %173 = vdwg.mxu0
    %174 = vmatpush.bf16.msra.mxu0 0
    %175 = vmatpush.bf16.msra.mxu0 0
    %176 = vmatpush.bf16.msra.mxu0 0
    %177 = vmatpush.bf16.msra.mxu0 %v152
    %178 = vmatpush.bf16.msra.mxu0 %v120
    %179 = vmatpush.bf16.msra.mxu0 %v116
    %180 = vmatpush.bf16.msra.mxu0 %v112
    %181 = vmatpush.bf16.msra.mxu0 %v108
    %182 = vmatmul.bf16.gmra.mxu0 %v145
    %v183 = vpop.f32.mrf.mxu0
    %v184 = vadd.f32 0.0, %v183
    %v185 = vpop.f32.mrf.mxu0
    %v186 = vadd.f32 0.0, %v185
    %187 = vdwg.mxu0
    %188 = vmatpush.bf16.msra.mxu0 0
    %189 = vmatpush.bf16.msra.mxu0 0
    %190 = vmatpush.bf16.msra.mxu0 0
    %191 = vmatpush.bf16.msra.mxu0 %v155
    %192 = vmatpush.bf16.msra.mxu0 %v121
    %193 = vmatpush.bf16.msra.mxu0 %v117
    %194 = vmatpush.bf16.msra.mxu0 %v113
    %195 = vmatpush.bf16.msra.mxu0 %v109
    %196 = vmatmul.bf16.gmra.mxu0 %v145
    %v197 = vpop.f32.mrf.mxu0
    %v198 = vadd.f32 0.0, %v197
    %v199 = vpop.f32.mrf.mxu0
    %v200 = vadd.f32 0.0, %v199
    %201 = vdwg.mxu0
    %202 = vmatpush.bf16.msra.mxu0 0
    %203 = vmatpush.bf16.msra.mxu0 0
    %204 = vmatpush.bf16.msra.mxu0 0
    %205 = vmatpush.bf16.msra.mxu0 %v158
    %206 = vmatpush.bf16.msra.mxu0 %v122
    %207 = vmatpush.bf16.msra.mxu0 %v118
    %208 = vmatpush.bf16.msra.mxu0 %v114
    %209 = vmatpush.bf16.msra.mxu0 %v110
    %210 = vmatmul.bf16.gmra.mxu0 %v145
    %v211 = vpop.f32.mrf.mxu0
    %v212 = vadd.f32 0.0, %v211
    %v213 = vpop.f32.mrf.mxu0
    %v214 = vadd.f32 0.0, %v213
    %215 = vdwg.mxu0
    %v216 = vmax.f32 %v170, %v184
    %v217 = vmax.f32 %v172, %v186
    %v218 = vmax.f32 %v198, %v212
    %v219 = vmax.f32 %v200, %v214
    %v220 = vmax.f32 %v216, %v218
    %v221 = vmax.f32 %v217, %v219
    %v222 = vld [vmem:[%s2] sm:$0xff]
    %v223 = vld [vmem:[%s2 + $0x8] sm:$0xff]
    %225 = vset.pattern.permute.xlu0 0
    %226 = vperm.xlu0 %225, %v222
    %v227 = vpop.permute.xlu0 %226
    %230 = vset.pattern.permute.xlu0 0
    %231 = vperm.xlu0 %230, %v223
    %v232 = vpop.permute.xlu0 %231
    %v234 = vadd.f32 %v220, %v227
    %v235 = vadd.f32 %v221, %v232
    %v236 = vmax.f32 %v234, 0.0
    %v237 = vmax.f32 %v235, 0.0
    %vm238 = vcmask 516096
    %239 = vst.msk [vmem:[#allocation2] sm:$0x1] %vm238, %v236
    %v241 = vrot.slane %v236, 7
    %v242 = vrot.slane %v241, 2
    %243 = vrot.lane.b32.xlu0 %v242, 64
    %v244 = vpop.permute.xlu0 %243
    %vm246 = vcmask 1040896
    %247 = vst.msk [vmem:[#allocation2] sm:$0x1] %vm246, %v244
    %248 = vst.sshfl [vmem:[#allocation1] sm:$0xff pattern:$0x73625140] %v236
    %s249 = scalar_lea.vmem [#allocation1], 1
    %v250 = vld [vmem:[%s249] ss:$4 sm:$0xff]
    %252 = vst.msk [vmem:[#allocation2 + $0x2] sm:$0x1] %vm238, %v250
    %253 = vst.sshfl [vmem:[#allocation1] sm:$0xff pattern:$0x73625140] %v236
    %s254 = scalar_lea.vmem [#allocation1], 1
    %v255 = vld [vmem:[%s254] ss:$4 sm:$0xff]
    %v256 = vrot.slane %v255, 7
    %v257 = vrot.slane %v256, 2
    %258 = vrot.lane.b32.xlu0 %v257, 64
    %v259 = vpop.permute.xlu0 %258
    %261 = vst.msk [vmem:[#allocation2 + $0x2] sm:$0x1] %vm246, %v259
    %262 = vst.sshfl [vmem:[#allocation1] sm:$0xff pattern:$0x73625140] %v236
    %s263 = scalar_lea.vmem [#allocation1], 2
    %v264 = vld [vmem:[%s263] ss:$4 sm:$0xff]
    %266 = vst.msk [vmem:[#allocation2 + $0x4] sm:$0x1] %vm238, %v264
    %267 = vst.sshfl [vmem:[#allocation1] sm:$0xff pattern:$0x73625140] %v236
    %s268 = scalar_lea.vmem [#allocation1], 2
    %v269 = vld [vmem:[%s268] ss:$4 sm:$0xff]
    %v270 = vrot.slane %v269, 7
    %v271 = vrot.slane %v270, 2
    %272 = vrot.lane.b32.xlu0 %v271, 64
    %v273 = vpop.permute.xlu0 %272
    %275 = vst.msk [vmem:[#allocation2 + $0x4] sm:$0x1] %vm246, %v273
    %276 = vst.sshfl [vmem:[#allocation1] sm:$0xff pattern:$0x73625140] %v236
    %s277 = scalar_lea.vmem [#allocation1], 3
    %v278 = vld [vmem:[%s277] ss:$4 sm:$0xff]
    %280 = vst.msk [vmem:[#allocation2 + $0x6] sm:$0x1] %vm238, %v278
    %281 = vst.sshfl [vmem:[#allocation1] sm:$0xff pattern:$0x73625140] %v236
    %s282 = scalar_lea.vmem [#allocation1], 3
    %v283 = vld [vmem:[%s282] ss:$4 sm:$0xff]
    %v284 = vrot.slane %v283, 7
    %v285 = vrot.slane %v284, 2
    %286 = vrot.lane.b32.xlu0 %v285, 64
    %v287 = vpop.permute.xlu0 %286
    %289 = vst.msk [vmem:[#allocation2 + $0x6] sm:$0x1] %vm246, %v287
    %290 = vst.msk [vmem:[#allocation2 + $0x8] sm:$0x1] %vm238, %v237
    %v292 = vrot.slane %v237, 7
    %v293 = vrot.slane %v292, 2
    %294 = vrot.lane.b32.xlu0 %v293, 64
    %v295 = vpop.permute.xlu0 %294
    %297 = vst.msk [vmem:[#allocation2 + $0x8] sm:$0x1] %vm246, %v295
    %298 = vst.sshfl [vmem:[#allocation1] sm:$0xff pattern:$0x73625140] %v237
    %s299 = scalar_lea.vmem [#allocation1], 1
    %v300 = vld [vmem:[%s299] ss:$4 sm:$0xff]
    %302 = vst.msk [vmem:[#allocation2 + $0xa] sm:$0x1] %vm238, %v300
    %303 = vst.sshfl [vmem:[#allocation1] sm:$0xff pattern:$0x73625140] %v237
    %s304 = scalar_lea.vmem [#allocation1], 1
    %v305 = vld [vmem:[%s304] ss:$4 sm:$0xff]
    %v306 = vrot.slane %v305, 7
    %v307 = vrot.slane %v306, 2
    %308 = vrot.lane.b32.xlu0 %v307, 64
    %v309 = vpop.permute.xlu0 %308
    %311 = vst.msk [vmem:[#allocation2 + $0xa] sm:$0x1] %vm246, %v309
    %312 = vst.sshfl [vmem:[#allocation1] sm:$0xff pattern:$0x73625140] %v237
    %s313 = scalar_lea.vmem [#allocation1], 2
    %v314 = vld [vmem:[%s313] ss:$4 sm:$0xff]
    %316 = vst.msk [vmem:[#allocation2 + $0xc] sm:$0x1] %vm238, %v314
    %317 = vst.sshfl [vmem:[#allocation1] sm:$0xff pattern:$0x73625140] %v237
    %s318 = scalar_lea.vmem [#allocation1], 2
    %v319 = vld [vmem:[%s318] ss:$4 sm:$0xff]
    %v320 = vrot.slane %v319, 7
    %v321 = vrot.slane %v320, 2
    %322 = vrot.lane.b32.xlu0 %v321, 64
    %v323 = vpop.permute.xlu0 %322
    %325 = vst.msk [vmem:[#allocation2 + $0xc] sm:$0x1] %vm246, %v323
    %326 = vst.sshfl [vmem:[#allocation1] sm:$0xff pattern:$0x73625140] %v237
    %s327 = scalar_lea.vmem [#allocation1], 3
    %v328 = vld [vmem:[%s327] ss:$4 sm:$0xff]
    %330 = vst.msk [vmem:[#allocation2 + $0xe] sm:$0x1] %vm238, %v328
    %331 = vst.sshfl [vmem:[#allocation1] sm:$0xff pattern:$0x73625140] %v237
    %s332 = scalar_lea.vmem [#allocation1], 3
    %v333 = vld [vmem:[%s332] ss:$4 sm:$0xff]
    %v334 = vrot.slane %v333, 7
    %v335 = vrot.slane %v334, 2
    %336 = vrot.lane.b32.xlu0 %v335, 64
    %v337 = vpop.permute.xlu0 %336
    %339 = vst.msk [vmem:[#allocation2 + $0xe] sm:$0x1] %vm246, %v337
    %340 = vrot.lane.b32.xlu0 %v236, 64
    %v341 = vpop.permute.xlu0 %340
    %343 = vst.msk [vmem:[#allocation2 + $0x1] sm:$0x1] %vm238, %v341
    %345 = vst.msk [vmem:[#allocation2 + $0x1] sm:$0x1] %vm246, %v242
    %346 = vst.sshfl [vmem:[#allocation1] sm:$0xff pattern:$0x73625140] %v236
    %s347 = scalar_lea.vmem [#allocation1], 1
    %v348 = vld [vmem:[%s347] ss:$4 sm:$0xff]
    %349 = vrot.lane.b32.xlu0 %v348, 64
    %v350 = vpop.permute.xlu0 %349
    %352 = vst.msk [vmem:[#allocation2 + $0x3] sm:$0x1] %vm238, %v350
    %353 = vst.sshfl [vmem:[#allocation1] sm:$0xff pattern:$0x73625140] %v236
    %s354 = scalar_lea.vmem [#allocation1], 1
    %v355 = vld [vmem:[%s354] ss:$4 sm:$0xff]
    %v356 = vrot.slane %v355, 7
    %v357 = vrot.slane %v356, 2
    %359 = vst.msk [vmem:[#allocation2 + $0x3] sm:$0x1] %vm246, %v357
    %360 = vst.sshfl [vmem:[#allocation1] sm:$0xff pattern:$0x73625140] %v236
    %s361 = scalar_lea.vmem [#allocation1], 2
    %v362 = vld [vmem:[%s361] ss:$4 sm:$0xff]
    %363 = vrot.lane.b32.xlu0 %v362, 64
    %v364 = vpop.permute.xlu0 %363
    %366 = vst.msk [vmem:[#allocation2 + $0x5] sm:$0x1] %vm238, %v364
    %367 = vst.sshfl [vmem:[#allocation1] sm:$0xff pattern:$0x73625140] %v236
    %s368 = scalar_lea.vmem [#allocation1], 2
    %v369 = vld [vmem:[%s368] ss:$4 sm:$0xff]
    %v370 = vrot.slane %v369, 7
    %v371 = vrot.slane %v370, 2
    %373 = vst.msk [vmem:[#allocation2 + $0x5] sm:$0x1] %vm246, %v371
    %374 = vst.sshfl [vmem:[#allocation1] sm:$0xff pattern:$0x73625140] %v236
    %s375 = scalar_lea.vmem [#allocation1], 3
    %v376 = vld [vmem:[%s375] ss:$4 sm:$0xff]
    %377 = vrot.lane.b32.xlu0 %v376, 64
    %v378 = vpop.permute.xlu0 %377
    %380 = vst.msk [vmem:[#allocation2 + $0x7] sm:$0x1] %vm238, %v378
    %381 = vst.sshfl [vmem:[#allocation1] sm:$0xff pattern:$0x73625140] %v236
    %s382 = scalar_lea.vmem [#allocation1], 3
    %v383 = vld [vmem:[%s382] ss:$4 sm:$0xff]
    %v384 = vrot.slane %v383, 7
    %v385 = vrot.slane %v384, 2
    %387 = vst.msk [vmem:[#allocation2 + $0x7] sm:$0x1] %vm246, %v385
    %388 = vrot.lane.b32.xlu0 %v237, 64
    %v389 = vpop.permute.xlu0 %388
    %391 = vst.msk [vmem:[#allocation2 + $0x9] sm:$0x1] %vm238, %v389
    %393 = vst.msk [vmem:[#allocation2 + $0x9] sm:$0x1] %vm246, %v293
    %394 = vst.sshfl [vmem:[#allocation1] sm:$0xff pattern:$0x73625140] %v237
    %s395 = scalar_lea.vmem [#allocation1], 1
    %v396 = vld [vmem:[%s395] ss:$4 sm:$0xff]
    %397 = vrot.lane.b32.xlu0 %v396, 64
    %v398 = vpop.permute.xlu0 %397
    %400 = vst.msk [vmem:[#allocation2 + $0xb] sm:$0x1] %vm238, %v398
    %401 = vst.sshfl [vmem:[#allocation1] sm:$0xff pattern:$0x73625140] %v237
    %s402 = scalar_lea.vmem [#allocation1], 1
    %v403 = vld [vmem:[%s402] ss:$4 sm:$0xff]
    %v404 = vrot.slane %v403, 7
    %v405 = vrot.slane %v404, 2
    %407 = vst.msk [vmem:[#allocation2 + $0xb] sm:$0x1] %vm246, %v405
    %408 = vst.sshfl [vmem:[#allocation1] sm:$0xff pattern:$0x73625140] %v237
    %s409 = scalar_lea.vmem [#allocation1], 2
    %v410 = vld [vmem:[%s409] ss:$4 sm:$0xff]
    %411 = vrot.lane.b32.xlu0 %v410, 64
    %v412 = vpop.permute.xlu0 %411
    %414 = vst.msk [vmem:[#allocation2 + $0xd] sm:$0x1] %vm238, %v412
    %415 = vst.sshfl [vmem:[#allocation1] sm:$0xff pattern:$0x73625140] %v237
    %s416 = scalar_lea.vmem [#allocation1], 2
    %v417 = vld [vmem:[%s416] ss:$4 sm:$0xff]
    %v418 = vrot.slane %v417, 7
    %v419 = vrot.slane %v418, 2
    %421 = vst.msk [vmem:[#allocation2 + $0xd] sm:$0x1] %vm246, %v419
    %422 = vst.sshfl [vmem:[#allocation1] sm:$0xff pattern:$0x73625140] %v237
    %s423 = scalar_lea.vmem [#allocation1], 3
    %v424 = vld [vmem:[%s423] ss:$4 sm:$0xff]
    %425 = vrot.lane.b32.xlu0 %v424, 64
    %v426 = vpop.permute.xlu0 %425
    %428 = vst.msk [vmem:[#allocation2 + $0xf] sm:$0x1] %vm238, %v426
    %429 = vst.sshfl [vmem:[#allocation1] sm:$0xff pattern:$0x73625140] %v237
    %s430 = scalar_lea.vmem [#allocation1], 3
    %v431 = vld [vmem:[%s430] ss:$4 sm:$0xff]
    %v432 = vrot.slane %v431, 7
    %v433 = vrot.slane %v432, 2
    %435 = vst.msk [vmem:[#allocation2 + $0xf] sm:$0x1] %vm246, %v433
    %v436 = vld [vmem:[#allocation2] sm:$0xff]
    %v437 = vld [vmem:[#allocation2 + $0x8] sm:$0xff]
    %440 = vst [vmem:[#allocation1] ss:$4 sm:$0xff] %v436
    %s441 = scalar_lea.vmem [#allocation1], 32
    %442 = vst [vmem:[%s441] ss:$4 sm:$0xff] %v437
    %v443 = vld.sshfl [vmem:[#allocation1] sm:$0xff pattern:$0x73625140]
    %v444 = vld.sshfl [vmem:[#allocation1 + $0x8] sm:$0xff pattern:$0x73625140]
    %v445 = vld.sshfl [vmem:[#allocation1 + $0x10] sm:$0xff pattern:$0x73625140]
    %v446 = vld.sshfl [vmem:[#allocation1 + $0x18] sm:$0xff pattern:$0x73625140]
    %v447 = vld.sshfl [vmem:[#allocation1 + $0x20] sm:$0xff pattern:$0x73625140]
    %v448 = vld.sshfl [vmem:[#allocation1 + $0x28] sm:$0xff pattern:$0x73625140]
    %v449 = vld.sshfl [vmem:[#allocation1 + $0x30] sm:$0xff pattern:$0x73625140]
    %v450 = vld.sshfl [vmem:[#allocation1 + $0x38] sm:$0xff pattern:$0x73625140]
    %v459 = vpack.c.bf16 %v443, %v443
    %v460 = vpack.c.bf16 %v444, %v444
    %v461 = vpack.c.bf16 %v445, %v445
    %v462 = vpack.c.bf16 %v446, %v446
    %v463 = vpack.c.bf16 %v447, %v447
    %v464 = vpack.c.bf16 %v448, %v448
    %v465 = vpack.c.bf16 %v449, %v449
    %v466 = vpack.c.bf16 %v450, %v450
    %v467 = vld [vmem:[%s3] sm:$0xf]
    %v468 = vld [vmem:[%s3 + $0x4] sm:$0xf]
    %v469 = vld [vmem:[%s3 + $0x8] sm:$0xf]
    %v470 = vld [vmem:[%s3 + $0xc] sm:$0xf]
    %v471 = vld [vmem:[%s3 + $0x10] sm:$0xf]
    %v472 = vld [vmem:[%s3 + $0x14] sm:$0xf]
    %v473 = vld [vmem:[%s3 + $0x18] sm:$0xf]
    %v474 = vld [vmem:[%s3 + $0x1c] sm:$0xf]
    %v475 = vld [vmem:[%s3 + $0x20] sm:$0xf]
    %v476 = vld [vmem:[%s3 + $0x24] sm:$0xf]
    %v477 = vld [vmem:[%s3 + $0x28] sm:$0xf]
    %v478 = vld [vmem:[%s3 + $0x2c] sm:$0xf]
    %v479 = vld [vmem:[%s3 + $0x30] sm:$0xf]
    %v480 = vld [vmem:[%s3 + $0x34] sm:$0xf]
    %v481 = vld [vmem:[%s3 + $0x38] sm:$0xf]
    %v482 = vld [vmem:[%s3 + $0x3c] sm:$0xf]
    %v483 = vld [vmem:[%s3 + $0x40] sm:$0xf]
    %v484 = vld [vmem:[%s3 + $0x44] sm:$0xf]
    %v485 = vld [vmem:[%s3 + $0x48] sm:$0xf]
    %v486 = vld [vmem:[%s3 + $0x4c] sm:$0xf]
    %v487 = vld [vmem:[%s3 + $0x50] sm:$0xf]
    %v488 = vld [vmem:[%s3 + $0x54] sm:$0xf]
    %v489 = vld [vmem:[%s3 + $0x58] sm:$0xf]
    %v490 = vld [vmem:[%s3 + $0x5c] sm:$0xf]
    %v491 = vld [vmem:[%s3 + $0x60] sm:$0xf]
    %v492 = vld [vmem:[%s3 + $0x64] sm:$0xf]
    %v493 = vld [vmem:[%s3 + $0x68] sm:$0xf]
    %v494 = vld [vmem:[%s3 + $0x6c] sm:$0xf]
    %v495 = vld [vmem:[%s3 + $0x70] sm:$0xf]
    %v496 = vld [vmem:[%s3 + $0x74] sm:$0xf]
    %v497 = vld [vmem:[%s3 + $0x78] sm:$0xf]
    %v498 = vld [vmem:[%s3 + $0x7c] sm:$0xf]
    %v499 = vld [vmem:[%s3 + $0x80] sm:$0xf]
    %v500 = vld [vmem:[%s3 + $0x84] sm:$0xf]
    %v501 = vld [vmem:[%s3 + $0x88] sm:$0xf]
    %v502 = vld [vmem:[%s3 + $0x8c] sm:$0xf]
    %v503 = vld [vmem:[%s3 + $0x90] sm:$0xf]
    %v504 = vld [vmem:[%s3 + $0x94] sm:$0xf]
    %v505 = vld [vmem:[%s3 + $0x98] sm:$0xf]
    %v506 = vld [vmem:[%s3 + $0x9c] sm:$0xf]
    %v507 = vld [vmem:[%s3 + $0xa0] sm:$0xf]
    %v508 = vld [vmem:[%s3 + $0xa4] sm:$0xf]
    %v509 = vld [vmem:[%s3 + $0xa8] sm:$0xf]
    %v510 = vld [vmem:[%s3 + $0xac] sm:$0xf]
    %v511 = vld [vmem:[%s3 + $0xb0] sm:$0xf]
    %v512 = vld [vmem:[%s3 + $0xb4] sm:$0xf]
    %v513 = vld [vmem:[%s3 + $0xb8] sm:$0xf]
    %v514 = vld [vmem:[%s3 + $0xbc] sm:$0xf]
    %v515 = vld [vmem:[%s3 + $0xc0] sm:$0xf]
    %v516 = vld [vmem:[%s3 + $0xc4] sm:$0xf]
    %v517 = vld [vmem:[%s3 + $0xc8] sm:$0xf]
    %v518 = vld [vmem:[%s3 + $0xcc] sm:$0xf]
    %v519 = vld [vmem:[%s3 + $0xd0] sm:$0xf]
    %v520 = vld [vmem:[%s3 + $0xd4] sm:$0xf]
    %v521 = vld [vmem:[%s3 + $0xd8] sm:$0xf]
    %v522 = vld [vmem:[%s3 + $0xdc] sm:$0xf]
    %v523 = vld [vmem:[%s3 + $0xe0] sm:$0xf]
    %v524 = vld [vmem:[%s3 + $0xe4] sm:$0xf]
    %v525 = vld [vmem:[%s3 + $0xe8] sm:$0xf]
    %v526 = vld [vmem:[%s3 + $0xec] sm:$0xf]
    %v527 = vld [vmem:[%s3 + $0xf0] sm:$0xf]
    %v528 = vld [vmem:[%s3 + $0xf4] sm:$0xf]
    %v529 = vld [vmem:[%s3 + $0xf8] sm:$0xf]
    %v530 = vld [vmem:[%s3 + $0xfc] sm:$0xf]
    %v531 = vld [vmem:[%s3 + $0x100] sm:$0xf]
    %v532 = vld [vmem:[%s3 + $0x104] sm:$0xf]
    %v533 = vld [vmem:[%s3 + $0x108] sm:$0xf]
    %v534 = vld [vmem:[%s3 + $0x10c] sm:$0xf]
    %v535 = vld [vmem:[%s3 + $0x110] sm:$0xf]
    %v536 = vld [vmem:[%s3 + $0x114] sm:$0xf]
    %v537 = vld [vmem:[%s3 + $0x118] sm:$0xf]
    %v538 = vld [vmem:[%s3 + $0x11c] sm:$0xf]
    %v539 = vld [vmem:[%s3 + $0x120] sm:$0xf]
    %v540 = vld [vmem:[%s3 + $0x124] sm:$0xf]
    %v541 = vld [vmem:[%s3 + $0x128] sm:$0xf]
    %v542 = vld [vmem:[%s3 + $0x12c] sm:$0xf]
    %v543 = vld [vmem:[%s3 + $0x130] sm:$0xf]
    %v544 = vld [vmem:[%s3 + $0x134] sm:$0xf]
    %v545 = vld [vmem:[%s3 + $0x138] sm:$0xf]
    %v546 = vld [vmem:[%s3 + $0x13c] sm:$0xf]
    %v547 = vld [vmem:[%s3 + $0x140] sm:$0xf]
    %v548 = vld [vmem:[%s3 + $0x144] sm:$0xf]
    %v549 = vld [vmem:[%s3 + $0x148] sm:$0xf]
    %v550 = vld [vmem:[%s3 + $0x14c] sm:$0xf]
    %v551 = vld [vmem:[%s3 + $0x150] sm:$0xf]
    %v552 = vld [vmem:[%s3 + $0x154] sm:$0xf]
    %v553 = vld [vmem:[%s3 + $0x158] sm:$0xf]
    %v554 = vld [vmem:[%s3 + $0x15c] sm:$0xf]
    %v555 = vld [vmem:[%s3 + $0x160] sm:$0xf]
    %v556 = vld [vmem:[%s3 + $0x164] sm:$0xf]
    %v557 = vld [vmem:[%s3 + $0x168] sm:$0xf]
    %v558 = vld [vmem:[%s3 + $0x16c] sm:$0xf]
    %v559 = vld [vmem:[%s3 + $0x170] sm:$0xf]
    %v560 = vld [vmem:[%s3 + $0x174] sm:$0xf]
    %v561 = vld [vmem:[%s3 + $0x178] sm:$0xf]
    %v562 = vld [vmem:[%s3 + $0x17c] sm:$0xf]
    %v563 = vld [vmem:[%s3 + $0x180] sm:$0xf]
    %v564 = vld [vmem:[%s3 + $0x184] sm:$0xf]
    %v565 = vld [vmem:[%s3 + $0x188] sm:$0xf]
    %v566 = vld [vmem:[%s3 + $0x18c] sm:$0xf]
    %v567 = vld [vmem:[%s3 + $0x190] sm:$0xf]
    %v568 = vld [vmem:[%s3 + $0x194] sm:$0xf]
    %v569 = vld [vmem:[%s3 + $0x198] sm:$0xf]
    %v570 = vld [vmem:[%s3 + $0x19c] sm:$0xf]
    %v571 = vld [vmem:[%s3 + $0x1a0] sm:$0xf]
    %v572 = vld [vmem:[%s3 + $0x1a4] sm:$0xf]
    %v573 = vld [vmem:[%s3 + $0x1a8] sm:$0xf]
    %v574 = vld [vmem:[%s3 + $0x1ac] sm:$0xf]
    %v575 = vld [vmem:[%s3 + $0x1b0] sm:$0xf]
    %v576 = vld [vmem:[%s3 + $0x1b4] sm:$0xf]
    %v577 = vld [vmem:[%s3 + $0x1b8] sm:$0xf]
    %v578 = vld [vmem:[%s3 + $0x1bc] sm:$0xf]
    %v579 = vld [vmem:[%s3 + $0x1c0] sm:$0xf]
    %v580 = vld [vmem:[%s3 + $0x1c4] sm:$0xf]
    %v581 = vld [vmem:[%s3 + $0x1c8] sm:$0xf]
    %v582 = vld [vmem:[%s3 + $0x1cc] sm:$0xf]
    %v583 = vld [vmem:[%s3 + $0x1d0] sm:$0xf]
    %v584 = vld [vmem:[%s3 + $0x1d4] sm:$0xf]
    %v585 = vld [vmem:[%s3 + $0x1d8] sm:$0xf]
    %v586 = vld [vmem:[%s3 + $0x1dc] sm:$0xf]
    %v587 = vld [vmem:[%s3 + $0x1e0] sm:$0xf]
    %v588 = vld [vmem:[%s3 + $0x1e4] sm:$0xf]
    %v589 = vld [vmem:[%s3 + $0x1e8] sm:$0xf]
    %v590 = vld [vmem:[%s3 + $0x1ec] sm:$0xf]
    %v591 = vld [vmem:[%s3 + $0x1f0] sm:$0xf]
    %v592 = vld [vmem:[%s3 + $0x1f4] sm:$0xf]
    %v593 = vld [vmem:[%s3 + $0x1f8] sm:$0xf]
    %v594 = vld [vmem:[%s3 + $0x1fc] sm:$0xf]
    %v595 = vld [vmem:[%s4] sm:$0x1]
    %v597 = vperm.slane %v595, 0
    %v727 = vunpack.c.l.b16 %v467
    %v728 = vunpack.c.l.b16 %v468
    %v729 = vunpack.c.l.b16 %v469
    %v730 = vunpack.c.l.b16 %v470
    %v731 = vunpack.c.l.b16 %v471
    %v732 = vunpack.c.l.b16 %v472
    %v733 = vunpack.c.l.b16 %v473
    %v734 = vunpack.c.l.b16 %v474
    %v735 = vunpack.c.l.b16 %v475
    %v736 = vunpack.c.l.b16 %v476
    %v737 = vunpack.c.l.b16 %v477
    %v738 = vunpack.c.l.b16 %v478
    %v739 = vunpack.c.l.b16 %v479
    %v740 = vunpack.c.l.b16 %v480
    %v741 = vunpack.c.l.b16 %v481
    %v742 = vunpack.c.l.b16 %v482
    %v743 = vunpack.c.l.b16 %v483
    %v744 = vunpack.c.l.b16 %v484
    %v745 = vunpack.c.l.b16 %v485
    %v746 = vunpack.c.l.b16 %v486
    %v747 = vunpack.c.l.b16 %v487
    %v748 = vunpack.c.l.b16 %v488
    %v749 = vunpack.c.l.b16 %v489
    %v750 = vunpack.c.l.b16 %v490
    %v751 = vunpack.c.l.b16 %v491
    %v752 = vunpack.c.l.b16 %v492
    %v753 = vunpack.c.l.b16 %v493
    %v754 = vunpack.c.l.b16 %v494
    %v755 = vunpack.c.l.b16 %v495
    %v756 = vunpack.c.l.b16 %v496
    %v757 = vunpack.c.l.b16 %v497
    %v758 = vunpack.c.l.b16 %v498
    %v759 = vunpack.c.l.b16 %v499
    %v760 = vunpack.c.l.b16 %v500
    %v761 = vunpack.c.l.b16 %v501
    %v762 = vunpack.c.l.b16 %v502
    %v763 = vunpack.c.l.b16 %v503
    %v764 = vunpack.c.l.b16 %v504
    %v765 = vunpack.c.l.b16 %v505
    %v766 = vunpack.c.l.b16 %v506
    %v767 = vunpack.c.l.b16 %v507
    %v768 = vunpack.c.l.b16 %v508
    %v769 = vunpack.c.l.b16 %v509
    %v770 = vunpack.c.l.b16 %v510
    %v771 = vunpack.c.l.b16 %v511
    %v772 = vunpack.c.l.b16 %v512
    %v773 = vunpack.c.l.b16 %v513
    %v774 = vunpack.c.l.b16 %v514
    %v775 = vunpack.c.l.b16 %v515
    %v776 = vunpack.c.l.b16 %v516
    %v777 = vunpack.c.l.b16 %v517
    %v778 = vunpack.c.l.b16 %v518
    %v779 = vunpack.c.l.b16 %v519
    %v780 = vunpack.c.l.b16 %v520
    %v781 = vunpack.c.l.b16 %v521
    %v782 = vunpack.c.l.b16 %v522
    %v783 = vunpack.c.l.b16 %v523
    %v784 = vunpack.c.l.b16 %v524
    %v785 = vunpack.c.l.b16 %v525
    %v786 = vunpack.c.l.b16 %v526
    %v787 = vunpack.c.l.b16 %v527
    %v788 = vunpack.c.l.b16 %v528
    %v789 = vunpack.c.l.b16 %v529
    %v790 = vunpack.c.l.b16 %v530
    %v791 = vunpack.c.l.b16 %v531
    %v792 = vunpack.c.l.b16 %v532
    %v793 = vunpack.c.l.b16 %v533
    %v794 = vunpack.c.l.b16 %v534
    %v795 = vunpack.c.l.b16 %v535
    %v796 = vunpack.c.l.b16 %v536
    %v797 = vunpack.c.l.b16 %v537
    %v798 = vunpack.c.l.b16 %v538
    %v799 = vunpack.c.l.b16 %v539
    %v800 = vunpack.c.l.b16 %v540
    %v801 = vunpack.c.l.b16 %v541
    %v802 = vunpack.c.l.b16 %v542
    %v803 = vunpack.c.l.b16 %v543
    %v804 = vunpack.c.l.b16 %v544
    %v805 = vunpack.c.l.b16 %v545
    %v806 = vunpack.c.l.b16 %v546
    %v807 = vunpack.c.l.b16 %v547
    %v808 = vunpack.c.l.b16 %v548
    %v809 = vunpack.c.l.b16 %v549
    %v810 = vunpack.c.l.b16 %v550
    %v811 = vunpack.c.l.b16 %v551
    %v812 = vunpack.c.l.b16 %v552
    %v813 = vunpack.c.l.b16 %v553
    %v814 = vunpack.c.l.b16 %v554
    %v815 = vunpack.c.l.b16 %v555
    %v816 = vunpack.c.l.b16 %v556
    %v817 = vunpack.c.l.b16 %v557
    %v818 = vunpack.c.l.b16 %v558
    %v819 = vunpack.c.l.b16 %v559
    %v820 = vunpack.c.l.b16 %v560
    %v821 = vunpack.c.l.b16 %v561
    %v822 = vunpack.c.l.b16 %v562
    %v823 = vunpack.c.l.b16 %v563
    %v824 = vunpack.c.l.b16 %v564
    %v825 = vunpack.c.l.b16 %v565
    %v826 = vunpack.c.l.b16 %v566
    %v827 = vunpack.c.l.b16 %v567
    %v828 = vunpack.c.l.b16 %v568
    %v829 = vunpack.c.l.b16 %v569
    %v830 = vunpack.c.l.b16 %v570
    %v831 = vunpack.c.l.b16 %v571
    %v832 = vunpack.c.l.b16 %v572
    %v833 = vunpack.c.l.b16 %v573
    %v834 = vunpack.c.l.b16 %v574
    %v835 = vunpack.c.l.b16 %v575
    %v836 = vunpack.c.l.b16 %v576
    %v837 = vunpack.c.l.b16 %v577
    %v838 = vunpack.c.l.b16 %v578
    %v839 = vunpack.c.l.b16 %v579
    %v840 = vunpack.c.l.b16 %v580
    %v841 = vunpack.c.l.b16 %v581
    %v842 = vunpack.c.l.b16 %v582
    %v843 = vunpack.c.l.b16 %v583
    %v844 = vunpack.c.l.b16 %v584
    %v845 = vunpack.c.l.b16 %v585
    %v846 = vunpack.c.l.b16 %v586
    %v847 = vunpack.c.l.b16 %v587
    %v848 = vunpack.c.l.b16 %v588
    %v849 = vunpack.c.l.b16 %v589
    %v850 = vunpack.c.l.b16 %v590
    %v851 = vunpack.c.l.b16 %v591
    %v852 = vunpack.c.l.b16 %v592
    %v853 = vunpack.c.l.b16 %v593
    %v854 = vunpack.c.l.b16 %v594
    %v855 = vpack.c.b16 %v728, %v727
    %v856 = vpack.c.b16 %v730, %v729
    %v857 = vpack.c.b16 %v732, %v731
    %v858 = vpack.c.b16 %v734, %v733
    %v859 = vpack.c.b16 %v736, %v735
    %v860 = vpack.c.b16 %v738, %v737
    %v861 = vpack.c.b16 %v740, %v739
    %v862 = vpack.c.b16 %v742, %v741
    %v863 = vpack.c.b16 %v744, %v743
    %v864 = vpack.c.b16 %v746, %v745
    %v865 = vpack.c.b16 %v748, %v747
    %v866 = vpack.c.b16 %v750, %v749
    %v867 = vpack.c.b16 %v752, %v751
    %v868 = vpack.c.b16 %v754, %v753
    %v869 = vpack.c.b16 %v756, %v755
    %v870 = vpack.c.b16 %v758, %v757
    %v871 = vpack.c.b16 %v760, %v759
    %v872 = vpack.c.b16 %v762, %v761
    %v873 = vpack.c.b16 %v764, %v763
    %v874 = vpack.c.b16 %v766, %v765
    %v875 = vpack.c.b16 %v768, %v767
    %v876 = vpack.c.b16 %v770, %v769
    %v877 = vpack.c.b16 %v772, %v771
    %v878 = vpack.c.b16 %v774, %v773
    %v879 = vpack.c.b16 %v776, %v775
    %v880 = vpack.c.b16 %v778, %v777
    %v881 = vpack.c.b16 %v780, %v779
    %v882 = vpack.c.b16 %v782, %v781
    %v883 = vpack.c.b16 %v784, %v783
    %v884 = vpack.c.b16 %v786, %v785
    %v885 = vpack.c.b16 %v788, %v787
    %v886 = vpack.c.b16 %v790, %v789
    %v887 = vpack.c.b16 %v792, %v791
    %v888 = vpack.c.b16 %v794, %v793
    %v889 = vpack.c.b16 %v796, %v795
    %v890 = vpack.c.b16 %v798, %v797
    %v891 = vpack.c.b16 %v800, %v799
    %v892 = vpack.c.b16 %v802, %v801
    %v893 = vpack.c.b16 %v804, %v803
    %v894 = vpack.c.b16 %v806, %v805
    %v895 = vpack.c.b16 %v808, %v807
    %v896 = vpack.c.b16 %v810, %v809
    %v897 = vpack.c.b16 %v812, %v811
    %v898 = vpack.c.b16 %v814, %v813
    %v899 = vpack.c.b16 %v816, %v815
    %v900 = vpack.c.b16 %v818, %v817
    %v901 = vpack.c.b16 %v820, %v819
    %v902 = vpack.c.b16 %v822, %v821
    %v903 = vpack.c.b16 %v824, %v823
    %v904 = vpack.c.b16 %v826, %v825
    %v905 = vpack.c.b16 %v828, %v827
    %v906 = vpack.c.b16 %v830, %v829
    %v907 = vpack.c.b16 %v832, %v831
    %v908 = vpack.c.b16 %v834, %v833
    %v909 = vpack.c.b16 %v836, %v835
    %v910 = vpack.c.b16 %v838, %v837
    %v911 = vpack.c.b16 %v840, %v839
    %v912 = vpack.c.b16 %v842, %v841
    %v913 = vpack.c.b16 %v844, %v843
    %v914 = vpack.c.b16 %v846, %v845
    %v915 = vpack.c.b16 %v848, %v847
    %v916 = vpack.c.b16 %v850, %v849
    %v917 = vpack.c.b16 %v852, %v851
    %v918 = vpack.c.b16 %v854, %v853
    %983 = vmatpush.bf16.msra.mxu0 %v862
    %984 = vmatpush.bf16.msra.mxu0 %v861
    %985 = vmatpush.bf16.msra.mxu0 %v860
    %986 = vmatpush.bf16.msra.mxu0 %v859
    %987 = vmatpush.bf16.msra.mxu0 %v858
    %988 = vmatpush.bf16.msra.mxu0 %v857
    %989 = vmatpush.bf16.msra.mxu0 %v856
    %990 = vmatpush.bf16.msra.mxu0 %v855
    %991 = vmatmul.bf16.gmra.mxu0 %v459
    %v992 = vpop.f32.mrf.mxu0
    %v993 = vadd.f32 %v597, %v992
    %v994 = vpop.f32.mrf.mxu0
    %995 = vdwg.mxu0
    %996 = vmatpush.bf16.msra.mxu0 %v870
    %997 = vmatpush.bf16.msra.mxu0 %v869
    %998 = vmatpush.bf16.msra.mxu0 %v868
    %999 = vmatpush.bf16.msra.mxu0 %v867
    %1000 = vmatpush.bf16.msra.mxu0 %v866
    %1001 = vmatpush.bf16.msra.mxu0 %v865
    %1002 = vmatpush.bf16.msra.mxu0 %v864
    %1003 = vmatpush.bf16.msra.mxu0 %v863
    %1004 = vmatmul.bf16.gmra.mxu0 %v460
    %v1005 = vpop.f32.mrf.mxu0
    %v1006 = vadd.f32 %v993, %v1005
    %v1007 = vpop.f32.mrf.mxu0
    %1008 = vdwg.mxu0
    %1009 = vmatpush.bf16.msra.mxu0 %v878
    %1010 = vmatpush.bf16.msra.mxu0 %v877
    %1011 = vmatpush.bf16.msra.mxu0 %v876
    %1012 = vmatpush.bf16.msra.mxu0 %v875
    %1013 = vmatpush.bf16.msra.mxu0 %v874
    %1014 = vmatpush.bf16.msra.mxu0 %v873
    %1015 = vmatpush.bf16.msra.mxu0 %v872
    %1016 = vmatpush.bf16.msra.mxu0 %v871
    %1017 = vmatmul.bf16.gmra.mxu0 %v461
    %v1018 = vpop.f32.mrf.mxu0
    %v1019 = vadd.f32 %v1006, %v1018
    %v1020 = vpop.f32.mrf.mxu0
    %1021 = vdwg.mxu0
    %1022 = vmatpush.bf16.msra.mxu0 %v886
    %1023 = vmatpush.bf16.msra.mxu0 %v885
    %1024 = vmatpush.bf16.msra.mxu0 %v884
    %1025 = vmatpush.bf16.msra.mxu0 %v883
    %1026 = vmatpush.bf16.msra.mxu0 %v882
    %1027 = vmatpush.bf16.msra.mxu0 %v881
    %1028 = vmatpush.bf16.msra.mxu0 %v880
    %1029 = vmatpush.bf16.msra.mxu0 %v879
    %1030 = vmatmul.bf16.gmra.mxu0 %v462
    %v1031 = vpop.f32.mrf.mxu0
    %v1032 = vadd.f32 %v1019, %v1031
    %v1033 = vpop.f32.mrf.mxu0
    %1034 = vdwg.mxu0
    %1035 = vmatpush.bf16.msra.mxu0 %v894
    %1036 = vmatpush.bf16.msra.mxu0 %v893
    %1037 = vmatpush.bf16.msra.mxu0 %v892
    %1038 = vmatpush.bf16.msra.mxu0 %v891
    %1039 = vmatpush.bf16.msra.mxu0 %v890
    %1040 = vmatpush.bf16.msra.mxu0 %v889
    %1041 = vmatpush.bf16.msra.mxu0 %v888
    %1042 = vmatpush.bf16.msra.mxu0 %v887
    %1043 = vmatmul.bf16.gmra.mxu0 %v463
    %v1044 = vpop.f32.mrf.mxu0
    %v1045 = vadd.f32 %v1032, %v1044
    %v1046 = vpop.f32.mrf.mxu0
    %1047 = vdwg.mxu0
    %1048 = vmatpush.bf16.msra.mxu0 %v902
    %1049 = vmatpush.bf16.msra.mxu0 %v901
    %1050 = vmatpush.bf16.msra.mxu0 %v900
    %1051 = vmatpush.bf16.msra.mxu0 %v899
    %1052 = vmatpush.bf16.msra.mxu0 %v898
    %1053 = vmatpush.bf16.msra.mxu0 %v897
    %1054 = vmatpush.bf16.msra.mxu0 %v896
    %1055 = vmatpush.bf16.msra.mxu0 %v895
    %1056 = vmatmul.bf16.gmra.mxu0 %v464
    %v1057 = vpop.f32.mrf.mxu0
    %v1058 = vadd.f32 %v1045, %v1057
    %v1059 = vpop.f32.mrf.mxu0
    %1060 = vdwg.mxu0
    %1061 = vmatpush.bf16.msra.mxu0 %v910
    %1062 = vmatpush.bf16.msra.mxu0 %v909
    %1063 = vmatpush.bf16.msra.mxu0 %v908
    %1064 = vmatpush.bf16.msra.mxu0 %v907
    %1065 = vmatpush.bf16.msra.mxu0 %v906
    %1066 = vmatpush.bf16.msra.mxu0 %v905
    %1067 = vmatpush.bf16.msra.mxu0 %v904
    %1068 = vmatpush.bf16.msra.mxu0 %v903
    %1069 = vmatmul.bf16.gmra.mxu0 %v465
    %v1070 = vpop.f32.mrf.mxu0
    %v1071 = vadd.f32 %v1058, %v1070
    %v1072 = vpop.f32.mrf.mxu0
    %1073 = vdwg.mxu0
    %1074 = vmatpush.bf16.msra.mxu0 %v918
    %1075 = vmatpush.bf16.msra.mxu0 %v917
    %1076 = vmatpush.bf16.msra.mxu0 %v916
    %1077 = vmatpush.bf16.msra.mxu0 %v915
    %1078 = vmatpush.bf16.msra.mxu0 %v914
    %1079 = vmatpush.bf16.msra.mxu0 %v913
    %1080 = vmatpush.bf16.msra.mxu0 %v912
    %1081 = vmatpush.bf16.msra.mxu0 %v911
    %1082 = vmatmul.bf16.gmra.mxu0 %v466
    %v1083 = vpop.f32.mrf.mxu0
    %v1084 = vadd.f32 %v1071, %v1083
    %v1085 = vpop.f32.mrf.mxu0
    %1086 = vdwg.mxu0
    %v1087 = vmax.f32 %v1084, 0.0
    %v1088 = vpack.c.bf16 %v1087, %v1087
    %v1089 = vld [vmem:[%s5] sm:$0xf]
    %v1090 = vld [vmem:[%s5 + $0x4] sm:$0xf]
    %v1091 = vld [vmem:[%s5 + $0x8] sm:$0xf]
    %v1092 = vld [vmem:[%s5 + $0xc] sm:$0xf]
    %v1093 = vld [vmem:[%s5 + $0x10] sm:$0xf]
    %v1094 = vld [vmem:[%s5 + $0x14] sm:$0xf]
    %v1095 = vld [vmem:[%s5 + $0x18] sm:$0xf]
    %v1096 = vld [vmem:[%s5 + $0x1c] sm:$0xf]
    %v1097 = vld [vmem:[%s6] sm:$0x1]
    %v1099 = vperm.slane %v1097, 0
    %v1109 = vunpack.c.l.b16 %v1089
    %v1110 = vunpack.c.l.b16 %v1090
    %v1111 = vunpack.c.l.b16 %v1091
    %v1112 = vunpack.c.l.b16 %v1092
    %v1113 = vunpack.c.l.b16 %v1093
    %v1114 = vunpack.c.l.b16 %v1094
    %v1115 = vunpack.c.l.b16 %v1095
    %v1116 = vunpack.c.l.b16 %v1096
    %v1117 = vpack.c.b16 %v1110, %v1109
    %v1118 = vpack.c.b16 %v1112, %v1111
    %v1119 = vpack.c.b16 %v1114, %v1113
    %v1120 = vpack.c.b16 %v1116, %v1115
    %vm1125 = vcmask 523264
    %v1127 = vsel %vm1125, %v1088, 0
    %1129 = vmatpush.bf16.msra.mxu0 0
    %1130 = vmatpush.bf16.msra.mxu0 0
    %1131 = vmatpush.bf16.msra.mxu0 0
    %1132 = vmatpush.bf16.msra.mxu0 0
    %1133 = vmatpush.bf16.msra.mxu0 %v1120
    %1134 = vmatpush.bf16.msra.mxu0 %v1119
    %1135 = vmatpush.bf16.msra.mxu0 %v1118
    %1136 = vmatpush.bf16.msra.mxu0 %v1117
    %1137 = vmatmul.bf16.gmra.mxu0 %v1127
    %v1138 = vpop.f32.mrf.mxu0
    %v1139 = vadd.f32 %v1099, %v1138
    %v1140 = vpop.f32.mrf.mxu0
    %1141 = vdwg.mxu0
    %1142 = vst [vmem:[#allocation3] sm:$0x3] %v1139
    // Predicated region
    $region30: #{piano_classifier_forward.3} parent=1 // pred_check
      _
    $region31: #{piano_classifier_forward.3} parent=1 // pred_check_branch
      %1144 = sbr.rel (0) target = $region33
    $region32: #{piano_classifier_forward.3} parent=1 // pred_region
      %1146 = vsyncadd [#allocation4], 0
      %s1148 = sshll.u32 [#allocation3], 4
      %s1149 = int_to_ptr.vmem [resolvable:$true] %s1148
      %s1150 = sshll.u32 %s7, 4
      %s1151 = int_to_ptr.hbm [resolvable:$true] %s1150
      %1153 = dma.vmem_to_hbm [thread:$0]  %s1149, 32, %s1151, [#allocation4]
    $region33: #{piano_classifier_forward.3} parent=1 // pred_fallthru
      _
    // Predicated region
    $region34: #{piano_classifier_forward.3} parent=1 // pred_check
      _
    $region35: #{piano_classifier_forward.3} parent=1 // pred_check_branch
      %1155 = sbr.rel (0) target = $region37
    $region36: #{piano_classifier_forward.3} parent=1 // pred_region
      %1157 = dma.done [#allocation4], 32
    $region37: #{piano_classifier_forward.3} parent=1 // pred_fallthru
      _
    %1158 = vsyncpa [#allocation4], 1

</llo_original>
